<compile_context>
chip_gen: v6e
topology: v6e:2x2x1
jax: 0.10.0
libtpu: 0.0.40
codegen_flags: <defaults>
</compile_context>

<pallas_src>
import functools

import numpy as np
import jax
import jax.numpy as jnp
from jax.experimental import pallas as pl
from jax.experimental.pallas import tpu as pltpu


# --------------------------------------------------------------------------
# Fused CBAM kernel: ChannelGate(LRHS) and SpatialGate(HRMS) per batch tile
# --------------------------------------------------------------------------
def cbam_kernel(lr_ref, hr_ref, w1_ref, b1_ref, w2_ref, b2_ref, wcols_ref,
                bn_ref, o_ch_ref, o_sp_ref, pfa_ref, pfb_ref,
                *, bt, C, H, W, K, pad, off_a, off_b):
    # lr_ref/hr_ref: (bt, C, HW)        o_ch_ref/o_sp_ref: (bt, C, HW)
    # w1_ref: (hidden, C)  b1_ref: (hidden, 1)
    # w2_ref: (C, hidden)  b2_ref: (C, 1)
    # wcols_ref: (2*bt, K*K) conv-weight columns (top bt rows: max-map weights,
    #            bottom bt rows: mean-map weights)
    # bn_ref: SMEM (2,) folded eval-mode BatchNorm [scale, bias]
    # pfa_ref: VMEM (2*bt, off_a + HW + pad)   horizontal-shift slack buffer
    # pfb_ref: VMEM (2*bt, off_b + HW + pad*W) vertical-shift slack buffer
    HW = H * W
    f32 = jnp.float32
    out_dtype = o_ch_ref.dtype

    # --- zero only the slack regions (interiors are fully rewritten below) --
    lpf_a = pfa_ref.shape[1]
    lpf_b = pfb_ref.shape[1]
    pfa_ref[:, 0:off_a] = jnp.zeros((2 * bt, off_a), f32)
    pfa_ref[:, off_a + HW:lpf_a] = jnp.zeros((2 * bt, lpf_a - off_a - HW), f32)
    pfb_ref[:, 0:off_b] = jnp.zeros((2 * bt, off_b), f32)
    pfb_ref[:, off_b + HW:lpf_b] = jnp.zeros((2 * bt, lpf_b - off_b - HW), f32)

    # --- per-image pooled statistics ----------------------------------------
    avg_cols = []
    max_cols = []
    for b in range(bt):
        lrf = lr_ref[b].astype(f32)                              # (C, HW)
        avg_cols.append(jnp.mean(lrf, axis=1, keepdims=True))    # (C, 1)
        max_cols.append(jnp.max(lrf, axis=1, keepdims=True))     # (C, 1)

        hrf = hr_ref[b].astype(f32)                              # (C, HW)
        # Stacked pooled maps: rows [0, bt) = channel max, rows [bt, 2bt) = mean.
        pfa_ref[b:b + 1, off_a:off_a + HW] = jnp.max(hrf, axis=0, keepdims=True)
        pfa_ref[bt + b:bt + b + 1, off_a:off_a + HW] = (
            jnp.sum(hrf, axis=0, keepdims=True) * (1.0 / C))

    # --- ChannelGate: one batched pass of the shared MLP (MXU) --------------
    pooled = jnp.concatenate(avg_cols + max_cols, axis=1)        # (C, 2*bt)
    h = jnp.dot(w1_ref[...], pooled,
                preferred_element_type=f32) + b1_ref[...]        # (hid, 2*bt)
    h = jnp.maximum(h, 0.0)
    att = jnp.dot(w2_ref[...], h,
                  preferred_element_type=f32) + b2_ref[...]      # (C, 2*bt)
    ch_scale = jax.nn.sigmoid(att[:, 0:bt] + att[:, bt:2 * bt])  # (C, bt)

    # --- SpatialGate: 7x7 "same" conv, factorised over taps -----------------
    # Column index generated in-kernel (exact integer arithmetic in f32).
    idx = jax.lax.broadcasted_iota(jnp.int32, (1, HW), 1).astype(f32)
    rowf = jnp.floor((idx + 0.5) * (1.0 / W))
    colf = idx - rowf * W                                        # column of pixel

    # 7 horizontally-shifted, column-masked copies of the stacked pooled maps.
    cj = []
    for dj in range(K):
        d = dj - pad
        sl = pfa_ref[:, off_a + d: off_a + d + HW]               # (2*bt, HW)
        if d == 0:
            cj.append(sl)
        else:
            m = ((colf >= float(-d)) & (colf <= float(W - 1 - d))).astype(f32)
            cj.append(m * sl)

    wc = wcols_ref[...]                                          # (2*bt, K*K)
    total = jnp.zeros((2 * bt, HW), f32)
    for di in range(K):                                          # row offsets
        a = jnp.zeros((2 * bt, HW), f32)
        for dj in range(K):                                      # col offsets
            t = di * K + dj
            a = a + wc[:, t:t + 1] * cj[dj]
        dv = (di - pad) * W
        if dv == 0:
            total = total + a
        else:
            # Single vertical shift per row offset via the zero-slack buffer
            # (slack zeros realise the vertical "same" padding).
            pfb_ref[:, off_b:off_b + HW] = a
            total = total + pfb_ref[:, off_b + dv: off_b + dv + HW]

    conv = total[0:bt] + total[bt:2 * bt]                        # (bt, HW)
    conv = conv * bn_ref[0] + bn_ref[1]                          # folded BN
    sp_scale = jax.nn.sigmoid(conv)                              # (bt, HW)

    # --- rescale & store (native I/O dtype, lane-dense) ---------------------
    for b in range(bt):
        o_ch_ref[b] = lr_ref[b] * ch_scale[:, b:b + 1].astype(out_dtype)
        o_sp_ref[b] = hr_ref[b] * sp_scale[b:b + 1, :].astype(out_dtype)


# --------------------------------------------------------------------------
# Wrapper
# --------------------------------------------------------------------------
def _pick_batch_tile(B, C, HW, itemsize):
    """Largest divisor of B that fits the VMEM budget and keeps >=2 grid steps."""
    per_img = C * HW * itemsize
    budget = 16 * 1024 * 1024          # resident tiles (2 in + 2 out, dbl-buffered)
    bt_cap = max(1, budget // (8 * per_img))
    bt_cap = int(min(bt_cap, 8, max(1, B // 2)))   # keep >=2 steps for v7x's 2 TCs
    for cand in range(min(bt_cap, B), 0, -1):
        if B % cand == 0:
            return cand
    return 1


def cbam_forward(lrhs, hrms, params):
    assert lrhs.shape == hrms.shape and lrhs.dtype == hrms.dtype
    B, C, H, W = lrhs.shape
    HW = H * W
    K = 7
    pad = (K - 1) // 2
    eps = 1e-5
    hidden = params["w1"].shape[0]
    assert hidden >= 1, "gate_channels must be >= reduction_ratio"

    bt = _pick_batch_tile(B, C, HW, lrhs.dtype.itemsize)
    grid = (B // bt,)

    # Slack-padded scratch geometry (leading slack rounded to 128 lanes so the
    # interior stores are lane-aligned).
    off_a = 128                                   # >= pad, lane aligned
    lpf_a = off_a + HW + pad
    off_b = ((pad * W + 127) // 128) * 128        # >= pad*W, lane aligned
    lpf_b = off_b + HW + pad * W

    w1 = params["w1"].astype(jnp.float32)                 # (hidden, C)
    b1 = params["b1"].reshape(hidden, 1).astype(jnp.float32)
    w2 = params["w2"].astype(jnp.float32)                 # (C, hidden)
    b2 = params["b2"].reshape(C, 1).astype(jnp.float32)

    # Per-tap conv-weight columns: top bt rows apply to the max map, bottom bt
    # rows to the mean map.
    w_max = params["conv_w"][0, 0].reshape(1, K * K).astype(jnp.float32)
    w_mean = params["conv_w"][0, 1].reshape(1, K * K).astype(jnp.float32)
    wcols = jnp.concatenate([jnp.tile(w_max, (bt, 1)),
                             jnp.tile(w_mean, (bt, 1))], axis=0)   # (2*bt, K*K)

    bn_scale = params["bn_gamma"] / jnp.sqrt(params["bn_var"] + eps)
    bn_bias = params["bn_beta"] - params["bn_mean"] * bn_scale
    bn = jnp.concatenate([bn_scale, bn_bias]).astype(jnp.float32)  # (2,)

    lr2 = lrhs.reshape(B, C, HW)                                   # free bitcast
    hr2 = hrms.reshape(B, C, HW)

    kern = functools.partial(cbam_kernel, bt=bt, C=C, H=H, W=W, K=K, pad=pad,
                             off_a=off_a, off_b=off_b)

    out_ch, out_sp = pl.pallas_call(
        kern,
        out_shape=(jax.ShapeDtypeStruct((B, C, HW), lrhs.dtype),
                   jax.ShapeDtypeStruct((B, C, HW), hrms.dtype)),
        grid_spec=pltpu.PrefetchScalarGridSpec(
            num_scalar_prefetch=0,
            grid=grid,
            in_specs=[
                pl.BlockSpec((bt, C, HW), lambda i: (i, 0, 0)),      # LRHS
                pl.BlockSpec((bt, C, HW), lambda i: (i, 0, 0)),      # HRMS
                pl.BlockSpec((hidden, C), lambda i: (0, 0)),         # w1
                pl.BlockSpec((hidden, 1), lambda i: (0, 0)),         # b1
                pl.BlockSpec((C, hidden), lambda i: (0, 0)),         # w2
                pl.BlockSpec((C, 1), lambda i: (0, 0)),              # b2
                pl.BlockSpec((2 * bt, K * K), lambda i: (0, 0)),     # conv cols
                pl.BlockSpec(memory_space=pltpu.MemorySpace.SMEM),   # bn
            ],
            out_specs=[
                pl.BlockSpec((bt, C, HW), lambda i: (i, 0, 0)),
                pl.BlockSpec((bt, C, HW), lambda i: (i, 0, 0)),
            ],
            scratch_shapes=[pltpu.VMEM((2 * bt, lpf_a), jnp.float32),
                            pltpu.VMEM((2 * bt, lpf_b), jnp.float32)],
        ),
        compiler_params=pltpu.CompilerParams(
            dimension_semantics=("parallel",),
            vmem_limit_bytes=32 * 1024 * 1024),
    )(lr2, hr2, w1, b1, w2, b2, wcols, bn)

    return out_ch.reshape(B, C, H, W), out_sp.reshape(B, C, H, W)


# --------------------------------------------------------------------------
# Deterministic parameter init (shapes match the PyTorch module __init__)
# --------------------------------------------------------------------------
def init_params(gate_channels, reduction_ratio=16, seed=42):
    hidden = gate_channels // reduction_ratio
    assert hidden >= 1, "gate_channels must be >= reduction_ratio"
    k = jax.random.split(jax.random.PRNGKey(seed), 5)
    return {
        # ChannelGate MLP: Linear(C, C//r), Linear(C//r, C)
        "w1": jax.random.normal(k[0], (hidden, gate_channels), jnp.float32) * 0.1,
        "b1": jax.random.normal(k[1], (hidden,), jnp.float32) * 0.1,
        "w2": jax.random.normal(k[2], (gate_channels, hidden), jnp.float32) * 0.1,
        "b2": jax.random.normal(k[3], (gate_channels,), jnp.float32) * 0.1,
        # SpatialGate: Conv2d(2, 1, 7, padding=3, bias=False) + BatchNorm2d(1)
        "conv_w": jax.random.normal(k[4], (1, 2, 7, 7), jnp.float32) * 0.1,
        "bn_gamma": jnp.ones((1,), jnp.float32),
        "bn_beta": jnp.zeros((1,), jnp.float32),
        "bn_mean": jnp.zeros((1,), jnp.float32),
        "bn_var": jnp.ones((1,), jnp.float32),
    }


# --------------------------------------------------------------------------
# Pure-JAX reference (correctness check only)
# --------------------------------------------------------------------------
def cbam_ref(lrhs, hrms, p):
    avg = jnp.mean(lrhs, axis=(2, 3))
    mx = jnp.max(lrhs, axis=(2, 3))

    def mlp(v):
        h = jnp.maximum(v @ p["w1"].T + p["b1"], 0.0)
        return h @ p["w2"].T + p["b2"]

    att = mlp(avg) + mlp(mx)
    ch = lrhs * jax.nn.sigmoid(att)[:, :, None, None]

    comp = jnp.stack([jnp.max(hrms, axis=1), jnp.mean(hrms, axis=1)], axis=1)
    conv = jax.lax.conv_general_dilated(
        comp, p["conv_w"], (1, 1), ((3, 3), (3, 3)),
        dimension_numbers=("NCHW", "OIHW", "NCHW"))
    eps = 1e-5
    scale = p["bn_gamma"] / jnp.sqrt(p["bn_var"] + eps)
    bias = p["bn_beta"] - p["bn_mean"] * scale
    conv = conv * scale.reshape(1, 1, 1, 1) + bias.reshape(1, 1, 1, 1)
    sp = hrms * jax.nn.sigmoid(conv)
    return ch, sp


if __name__ == "__main__":
    # gate_channels=32 (must be >= reduction_ratio=16), small spatial size.
    B, C, H, W = 2, 32, 16, 16
    key = jax.random.PRNGKey(0)
    k1, k2 = jax.random.split(key)
    LRHS = jax.random.normal(k1, (B, C, H, W), jnp.float32)
    HRMS = jax.random.normal(k2, (B, C, H, W), jnp.float32)

    params = init_params(C, reduction_ratio=16)

    attention_spe, attention_spa = cbam_forward(LRHS, HRMS, params)
    jax.block_until_ready((attention_spe, attention_spa))

    ref_spe, ref_spa = cbam_ref(LRHS, HRMS, params)
    np.testing.assert_allclose(np.asarray(attention_spe), np.asarray(ref_spe),
                               rtol=1e-4, atol=1e-4)
    np.testing.assert_allclose(np.asarray(attention_spa), np.asarray(ref_spa),
                               rtol=1e-4, atol=1e-4)
    print("KERNEL_OK")
</pallas_src>

<mosaic_0001>
module attributes {stable_mosaic.version = 11 : i64} {
  func.func @cbam_kernel(%arg0: i32, %arg1: memref<1x32x256xf32, #tpu.memory_space<vmem>>, %arg2: memref<1x32x256xf32, #tpu.memory_space<vmem>>, %arg3: memref<2x32xf32, #tpu.memory_space<vmem>>, %arg4: memref<2x1xf32, #tpu.memory_space<vmem>>, %arg5: memref<32x2xf32, #tpu.memory_space<vmem>>, %arg6: memref<32x1xf32, #tpu.memory_space<vmem>>, %arg7: memref<2x49xf32, #tpu.memory_space<vmem>>, %arg8: memref<2xf32, #tpu.memory_space<smem>>, %arg9: memref<1x32x256xf32, #tpu.memory_space<vmem>>, %arg10: memref<1x32x256xf32, #tpu.memory_space<vmem>>, %arg11: memref<2x387xf32, #tpu.memory_space<vmem>>, %arg12: memref<2x432xf32, #tpu.memory_space<vmem>>) attributes {dimension_semantics = [#tpu.dimension_semantics<parallel>], iteration_bounds = array<i64: 2>, scalar_prefetch = 0 : i64, scratch_operands = 2 : i64, tpu.core_type = #tpu.core_type<tc>, window_params = [{transform_indices = @transform_0, window_bounds = array<i64: 1, 32, 256>}, {transform_indices = @transform_1, window_bounds = array<i64: 1, 32, 256>}, {pipeline_mode = #tpu.pipeline_mode<synchronous>, transform_indices = @transform_2, window_bounds = array<i64: 2, 32>}, {pipeline_mode = #tpu.pipeline_mode<synchronous>, transform_indices = @transform_3, window_bounds = array<i64: 2, 1>}, {pipeline_mode = #tpu.pipeline_mode<synchronous>, transform_indices = @transform_4, window_bounds = array<i64: 32, 2>}, {pipeline_mode = #tpu.pipeline_mode<synchronous>, transform_indices = @transform_5, window_bounds = array<i64: 32, 1>}, {pipeline_mode = #tpu.pipeline_mode<synchronous>, transform_indices = @transform_6, window_bounds = array<i64: 2, 49>}, {transform_indices = @transform_7, window_bounds = array<i64: 2>}, {transform_indices = @transform_8, window_bounds = array<i64: 1, 32, 256>}, {transform_indices = @transform_9, window_bounds = array<i64: 1, 32, 256>}]} {
    %cst = arith.constant 0.000000e+00 : f32
    %0 = vector.broadcast %cst : f32 to vector<2x128xf32>
    %c0 = arith.constant 0 : index
    %c0_0 = arith.constant 0 : index
    %1 = vector.load %arg11[%c0, %c0_0] : memref<2x387xf32, #tpu.memory_space<vmem>>, vector<2x128xf32>
    tpu.vector_store %arg11[%c0, %c0_0], %0 {strides = array<i32>} : memref<2x387xf32, #tpu.memory_space<vmem>>, vector<2x128xf32>,
    %cst_1 = arith.constant 0.000000e+00 : f32
    %2 = vector.broadcast %cst_1 : f32 to vector<2x3xf32>
    %c0_2 = arith.constant 0 : index
    %c384 = arith.constant 384 : index
    %3 = vector.load %arg11[%c0_2, %c384] : memref<2x387xf32, #tpu.memory_space<vmem>>, vector<2x3xf32>
    tpu.vector_store %arg11[%c0_2, %c384], %2 {strides = array<i32>} : memref<2x387xf32, #tpu.memory_space<vmem>>, vector<2x3xf32>,
    %cst_3 = arith.constant 0.000000e+00 : f32
    %4 = vector.broadcast %cst_3 : f32 to vector<2x128xf32>
    %c0_4 = arith.constant 0 : index
    %c0_5 = arith.constant 0 : index
    %5 = vector.load %arg12[%c0_4, %c0_5] : memref<2x432xf32, #tpu.memory_space<vmem>>, vector<2x128xf32>
    tpu.vector_store %arg12[%c0_4, %c0_5], %4 {strides = array<i32>} : memref<2x432xf32, #tpu.memory_space<vmem>>, vector<2x128xf32>,
    %cst_6 = arith.constant 0.000000e+00 : f32
    %6 = vector.broadcast %cst_6 : f32 to vector<2x48xf32>
    %c0_7 = arith.constant 0 : index
    %c384_8 = arith.constant 384 : index
    %7 = vector.load %arg12[%c0_7, %c384_8] : memref<2x432xf32, #tpu.memory_space<vmem>>, vector<2x48xf32>
    tpu.vector_store %arg12[%c0_7, %c384_8], %6 {strides = array<i32>} : memref<2x432xf32, #tpu.memory_space<vmem>>, vector<2x48xf32>,
    %c0_9 = arith.constant 0 : index
    %c0_10 = arith.constant 0 : index
    %c0_11 = arith.constant 0 : index
    %8 = vector.load %arg1[%c0_9, %c0_10, %c0_11] : memref<1x32x256xf32, #tpu.memory_space<vmem>>, vector<1x32x256xf32>
    %9 = vector.shape_cast %8 : vector<1x32x256xf32> to vector<32x256xf32>
    %cst_12 = arith.constant dense<0.000000e+00> : vector<32xf32>
    %10 = vector.multi_reduction <add>, %9, %cst_12 [1] : vector<32x256xf32> to vector<32xf32>
    %11 = vector.shape_cast %10 : vector<32xf32> to vector<32x1xf32>
    %cst_13 = arith.constant 2.560000e+02 : f32
    %12 = vector.broadcast %cst_13 : f32 to vector<32x1xf32>
    %13 = arith.divf %11, %12 : vector<32x1xf32>
    %cst_14 = arith.constant dense<0xFF800000> : vector<32xf32>
    %14 = vector.multi_reduction <maximumf>, %9, %cst_14 [1] : vector<32x256xf32> to vector<32xf32>
    %15 = vector.shape_cast %14 : vector<32xf32> to vector<32x1xf32>
    %c0_15 = arith.constant 0 : index
    %c0_16 = arith.constant 0 : index
    %c0_17 = arith.constant 0 : index
    %16 = vector.load %arg2[%c0_15, %c0_16, %c0_17] : memref<1x32x256xf32, #tpu.memory_space<vmem>>, vector<1x32x256xf32>
    %17 = vector.shape_cast %16 : vector<1x32x256xf32> to vector<32x256xf32>
    %cst_18 = arith.constant dense<0xFF800000> : vector<256xf32>
    %18 = vector.multi_reduction <maximumf>, %17, %cst_18 [0] : vector<32x256xf32> to vector<256xf32>
    %19 = vector.shape_cast %18 : vector<256xf32> to vector<1x256xf32>
    %c0_19 = arith.constant 0 : index
    %c128 = arith.constant 128 : index
    %20 = vector.load %arg11[%c0_19, %c128] : memref<2x387xf32, #tpu.memory_space<vmem>>, vector<1x256xf32>
    tpu.vector_store %arg11[%c0_19, %c128], %19 {strides = array<i32>} : memref<2x387xf32, #tpu.memory_space<vmem>>, vector<1x256xf32>,
    %cst_20 = arith.constant dense<0.000000e+00> : vector<256xf32>
    %21 = vector.multi_reduction <add>, %17, %cst_20 [0] : vector<32x256xf32> to vector<256xf32>
    %22 = vector.shape_cast %21 : vector<256xf32> to vector<1x256xf32>
    %cst_21 = arith.constant 3.125000e-02 : f32
    %23 = vector.broadcast %cst_21 : f32 to vector<1x256xf32>
    %24 = arith.mulf %22, %23 : vector<1x256xf32>
    %c1 = arith.constant 1 : index
    %c128_22 = arith.constant 128 : index
    %25 = vector.load %arg11[%c1, %c128_22] : memref<2x387xf32, #tpu.memory_space<vmem>>, vector<1x256xf32>
    tpu.vector_store %arg11[%c1, %c128_22], %24 {strides = array<i32>} : memref<2x387xf32, #tpu.memory_space<vmem>>, vector<1x256xf32>,
    %26 = tpu.concatenate %13, %15 in 1 : vector<32x1xf32>, vector<32x1xf32> -> vector<32x2xf32>
    %c0_23 = arith.constant 0 : index
    %c0_24 = arith.constant 0 : index
    %27 = vector.load %arg3[%c0_23, %c0_24] : memref<2x32xf32, #tpu.memory_space<vmem>>, vector<2x32xf32>
    %cst_25 = arith.constant dense<0.000000e+00> : vector<2x2xf32>
    %28 = tpu.matmul %27, %26, %cst_25 {dimension_numbers = #tpu.dot_dimension_numbers<[1], [0], [0], [1], [0, 0, 1, 1], [], []>} : vector<2x32xf32>, vector<32x2xf32>, vector<2x2xf32> -> vector<2x2xf32>
    %c0_26 = arith.constant 0 : index
    %c0_27 = arith.constant 0 : index
    %29 = vector.load %arg4[%c0_26, %c0_27] : memref<2x1xf32, #tpu.memory_space<vmem>>, vector<2x1xf32>
    %30 = vector.broadcast %29 : vector<2x1xf32> to vector<2x2xf32>
    %31 = arith.addf %28, %30 : vector<2x2xf32>
    %cst_28 = arith.constant 0.000000e+00 : f32
    %32 = vector.broadcast %cst_28 : f32 to vector<2x2xf32>
    %33 = arith.maximumf %31, %32 : vector<2x2xf32>
    %c0_29 = arith.constant 0 : index
    %c0_30 = arith.constant 0 : index
    %34 = vector.load %arg5[%c0_29, %c0_30] : memref<32x2xf32, #tpu.memory_space<vmem>>, vector<32x2xf32>
    %cst_31 = arith.constant dense<0.000000e+00> : vector<32x2xf32>
    %35 = tpu.matmul %34, %33, %cst_31 {dimension_numbers = #tpu.dot_dimension_numbers<[1], [0], [0], [1], [0, 0, 1, 1], [], []>} : vector<32x2xf32>, vector<2x2xf32>, vector<32x2xf32> -> vector<32x2xf32>
    %c0_32 = arith.constant 0 : index
    %c0_33 = arith.constant 0 : index
    %36 = vector.load %arg6[%c0_32, %c0_33] : memref<32x1xf32, #tpu.memory_space<vmem>>, vector<32x1xf32>
    %37 = vector.broadcast %36 : vector<32x1xf32> to vector<32x2xf32>
    %38 = arith.addf %35, %37 : vector<32x2xf32>
    %39 = vector.extract_strided_slice %38 {offsets = [0, 0], sizes = [32, 1], strides = [1, 1]} : vector<32x2xf32> to vector<32x1xf32>
    %40 = vector.extract_strided_slice %38 {offsets = [0, 1], sizes = [32, 1], strides = [1, 1]} : vector<32x2xf32> to vector<32x1xf32>
    %41 = arith.addf %39, %40 : vector<32x1xf32>
    %42 = arith.negf %41 : vector<32x1xf32>
    %43 = math.exp %42 : vector<32x1xf32>
    %cst_34 = arith.constant 1.000000e+00 : f32
    %44 = vector.broadcast %cst_34 : f32 to vector<32x1xf32>
    %45 = arith.addf %44, %43 : vector<32x1xf32>
    %46 = arith.divf %44, %45 : vector<32x1xf32>
    %47 = tpu.iota {dimensions = array<i32: 1>} : vector<1x256xi32>
    %48 = arith.sitofp %47 : vector<1x256xi32> to vector<1x256xf32>
    %cst_35 = arith.constant 5.000000e-01 : f32
    %49 = vector.broadcast %cst_35 : f32 to vector<1x256xf32>
    %50 = arith.addf %48, %49 : vector<1x256xf32>
    %cst_36 = arith.constant 6.250000e-02 : f32
    %51 = vector.broadcast %cst_36 : f32 to vector<1x256xf32>
    %52 = arith.mulf %50, %51 : vector<1x256xf32>
    %53 = math.floor %52 : vector<1x256xf32>
    %cst_37 = arith.constant 1.600000e+01 : f32
    %54 = vector.broadcast %cst_37 : f32 to vector<1x256xf32>
    %55 = arith.mulf %53, %54 : vector<1x256xf32>
    %56 = arith.subf %48, %55 : vector<1x256xf32>
    %c0_38 = arith.constant 0 : index
    %c125 = arith.constant 125 : index
    %57 = vector.load %arg11[%c0_38, %c125] : memref<2x387xf32, #tpu.memory_space<vmem>>, vector<2x256xf32>
    %cst_39 = arith.constant 3.000000e+00 : f32
    %58 = vector.broadcast %cst_39 : f32 to vector<1x256xf32>
    %59 = arith.cmpf oge, %56, %58 : vector<1x256xf32>
    %cst_40 = arith.constant 1.800000e+01 : f32
    %60 = vector.broadcast %cst_40 : f32 to vector<1x256xf32>
    %61 = arith.cmpf ole, %56, %60 : vector<1x256xf32>
    %62 = arith.andi %59, %61 : vector<1x256xi1>
    %63 = arith.extui %62 : vector<1x256xi1> to vector<1x256xi32>
    %64 = arith.sitofp %63 : vector<1x256xi32> to vector<1x256xf32>
    %65 = vector.broadcast %64 : vector<1x256xf32> to vector<2x256xf32>
    %66 = arith.mulf %65, %57 : vector<2x256xf32>
    %c0_41 = arith.constant 0 : index
    %c126 = arith.constant 126 : index
    %67 = vector.load %arg11[%c0_41, %c126] : memref<2x387xf32, #tpu.memory_space<vmem>>, vector<2x256xf32>
    %cst_42 = arith.constant 2.000000e+00 : f32
    %68 = vector.broadcast %cst_42 : f32 to vector<1x256xf32>
    %69 = arith.cmpf oge, %56, %68 : vector<1x256xf32>
    %cst_43 = arith.constant 1.700000e+01 : f32
    %70 = vector.broadcast %cst_43 : f32 to vector<1x256xf32>
    %71 = arith.cmpf ole, %56, %70 : vector<1x256xf32>
    %72 = arith.andi %69, %71 : vector<1x256xi1>
    %73 = arith.extui %72 : vector<1x256xi1> to vector<1x256xi32>
    %74 = arith.sitofp %73 : vector<1x256xi32> to vector<1x256xf32>
    %75 = vector.broadcast %74 : vector<1x256xf32> to vector<2x256xf32>
    %76 = arith.mulf %75, %67 : vector<2x256xf32>
    %c0_44 = arith.constant 0 : index
    %c127 = arith.constant 127 : index
    %77 = vector.load %arg11[%c0_44, %c127] : memref<2x387xf32, #tpu.memory_space<vmem>>, vector<2x256xf32>
    %cst_45 = arith.constant 1.000000e+00 : f32
    %78 = vector.broadcast %cst_45 : f32 to vector<1x256xf32>
    %79 = arith.cmpf oge, %56, %78 : vector<1x256xf32>
    %cst_46 = arith.constant 1.600000e+01 : f32
    %80 = vector.broadcast %cst_46 : f32 to vector<1x256xf32>
    %81 = arith.cmpf ole, %56, %80 : vector<1x256xf32>
    %82 = arith.andi %79, %81 : vector<1x256xi1>
    %83 = arith.extui %82 : vector<1x256xi1> to vector<1x256xi32>
    %84 = arith.sitofp %83 : vector<1x256xi32> to vector<1x256xf32>
    %85 = vector.broadcast %84 : vector<1x256xf32> to vector<2x256xf32>
    %86 = arith.mulf %85, %77 : vector<2x256xf32>
    %c0_47 = arith.constant 0 : index
    %c128_48 = arith.constant 128 : index
    %87 = vector.load %arg11[%c0_47, %c128_48] : memref<2x387xf32, #tpu.memory_space<vmem>>, vector<2x256xf32>
    %c0_49 = arith.constant 0 : index
    %c129 = arith.constant 129 : index
    %88 = vector.load %arg11[%c0_49, %c129] : memref<2x387xf32, #tpu.memory_space<vmem>>, vector<2x256xf32>
    %cst_50 = arith.constant -1.000000e+00 : f32
    %89 = vector.broadcast %cst_50 : f32 to vector<1x256xf32>
    %90 = arith.cmpf oge, %56, %89 : vector<1x256xf32>
    %cst_51 = arith.constant 1.400000e+01 : f32
    %91 = vector.broadcast %cst_51 : f32 to vector<1x256xf32>
    %92 = arith.cmpf ole, %56, %91 : vector<1x256xf32>
    %93 = arith.andi %90, %92 : vector<1x256xi1>
    %94 = arith.extui %93 : vector<1x256xi1> to vector<1x256xi32>
    %95 = arith.sitofp %94 : vector<1x256xi32> to vector<1x256xf32>
    %96 = vector.broadcast %95 : vector<1x256xf32> to vector<2x256xf32>
    %97 = arith.mulf %96, %88 : vector<2x256xf32>
    %c0_52 = arith.constant 0 : index
    %c130 = arith.constant 130 : index
    %98 = vector.load %arg11[%c0_52, %c130] : memref<2x387xf32, #tpu.memory_space<vmem>>, vector<2x256xf32>
    %cst_53 = arith.constant -2.000000e+00 : f32
    %99 = vector.broadcast %cst_53 : f32 to vector<1x256xf32>
    %100 = arith.cmpf oge, %56, %99 : vector<1x256xf32>
    %cst_54 = arith.constant 1.300000e+01 : f32
    %101 = vector.broadcast %cst_54 : f32 to vector<1x256xf32>
    %102 = arith.cmpf ole, %56, %101 : vector<1x256xf32>
    %103 = arith.andi %100, %102 : vector<1x256xi1>
    %104 = arith.extui %103 : vector<1x256xi1> to vector<1x256xi32>
    %105 = arith.sitofp %104 : vector<1x256xi32> to vector<1x256xf32>
    %106 = vector.broadcast %105 : vector<1x256xf32> to vector<2x256xf32>
    %107 = arith.mulf %106, %98 : vector<2x256xf32>
    %c0_55 = arith.constant 0 : index
    %c131 = arith.constant 131 : index
    %108 = vector.load %arg11[%c0_55, %c131] : memref<2x387xf32, #tpu.memory_space<vmem>>, vector<2x256xf32>
    %cst_56 = arith.constant -3.000000e+00 : f32
    %109 = vector.broadcast %cst_56 : f32 to vector<1x256xf32>
    %110 = arith.cmpf oge, %56, %109 : vector<1x256xf32>
    %cst_57 = arith.constant 1.200000e+01 : f32
    %111 = vector.broadcast %cst_57 : f32 to vector<1x256xf32>
    %112 = arith.cmpf ole, %56, %111 : vector<1x256xf32>
    %113 = arith.andi %110, %112 : vector<1x256xi1>
    %114 = arith.extui %113 : vector<1x256xi1> to vector<1x256xi32>
    %115 = arith.sitofp %114 : vector<1x256xi32> to vector<1x256xf32>
    %116 = vector.broadcast %115 : vector<1x256xf32> to vector<2x256xf32>
    %117 = arith.mulf %116, %108 : vector<2x256xf32>
    %c0_58 = arith.constant 0 : index
    %c0_59 = arith.constant 0 : index
    %118 = vector.load %arg7[%c0_58, %c0_59] : memref<2x49xf32, #tpu.memory_space<vmem>>, vector<2x49xf32>
    %cst_60 = arith.constant 0.000000e+00 : f32
    %119 = vector.broadcast %cst_60 : f32 to vector<2x256xf32>
    %cst_61 = arith.constant 0.000000e+00 : f32
    %120 = vector.broadcast %cst_61 : f32 to vector<2x256xf32>
    %121 = vector.extract_strided_slice %118 {offsets = [0, 0], sizes = [2, 1], strides = [1, 1]} : vector<2x49xf32> to vector<2x1xf32>
    %122 = vector.broadcast %121 : vector<2x1xf32> to vector<2x256xf32>
    %123 = arith.mulf %122, %66 : vector<2x256xf32>
    %124 = arith.addf %120, %123 : vector<2x256xf32>
    %125 = vector.extract_strided_slice %118 {offsets = [0, 1], sizes = [2, 1], strides = [1, 1]} : vector<2x49xf32> to vector<2x1xf32>
    %126 = vector.broadcast %125 : vector<2x1xf32> to vector<2x256xf32>
    %127 = arith.mulf %126, %76 : vector<2x256xf32>
    %128 = arith.addf %124, %127 : vector<2x256xf32>
    %129 = vector.extract_strided_slice %118 {offsets = [0, 2], sizes = [2, 1], strides = [1, 1]} : vector<2x49xf32> to vector<2x1xf32>
    %130 = vector.broadcast %129 : vector<2x1xf32> to vector<2x256xf32>
    %131 = arith.mulf %130, %86 : vector<2x256xf32>
    %132 = arith.addf %128, %131 : vector<2x256xf32>
    %133 = vector.extract_strided_slice %118 {offsets = [0, 3], sizes = [2, 1], strides = [1, 1]} : vector<2x49xf32> to vector<2x1xf32>
    %134 = vector.broadcast %133 : vector<2x1xf32> to vector<2x256xf32>
    %135 = arith.mulf %134, %87 : vector<2x256xf32>
    %136 = arith.addf %132, %135 : vector<2x256xf32>
    %137 = vector.extract_strided_slice %118 {offsets = [0, 4], sizes = [2, 1], strides = [1, 1]} : vector<2x49xf32> to vector<2x1xf32>
    %138 = vector.broadcast %137 : vector<2x1xf32> to vector<2x256xf32>
    %139 = arith.mulf %138, %97 : vector<2x256xf32>
    %140 = arith.addf %136, %139 : vector<2x256xf32>
    %141 = vector.extract_strided_slice %118 {offsets = [0, 5], sizes = [2, 1], strides = [1, 1]} : vector<2x49xf32> to vector<2x1xf32>
    %142 = vector.broadcast %141 : vector<2x1xf32> to vector<2x256xf32>
    %143 = arith.mulf %142, %107 : vector<2x256xf32>
    %144 = arith.addf %140, %143 : vector<2x256xf32>
    %145 = vector.extract_strided_slice %118 {offsets = [0, 6], sizes = [2, 1], strides = [1, 1]} : vector<2x49xf32> to vector<2x1xf32>
    %146 = vector.broadcast %145 : vector<2x1xf32> to vector<2x256xf32>
    %147 = arith.mulf %146, %117 : vector<2x256xf32>
    %148 = arith.addf %144, %147 : vector<2x256xf32>
    %c0_62 = arith.constant 0 : index
    %c128_63 = arith.constant 128 : index
    %149 = vector.load %arg12[%c0_62, %c128_63] : memref<2x432xf32, #tpu.memory_space<vmem>>, vector<2x256xf32>
    tpu.vector_store %arg12[%c0_62, %c128_63], %148 {strides = array<i32>} : memref<2x432xf32, #tpu.memory_space<vmem>>, vector<2x256xf32>,
    %c0_64 = arith.constant 0 : index
    %c80 = arith.constant 80 : index
    %150 = vector.load %arg12[%c0_64, %c80] : memref<2x432xf32, #tpu.memory_space<vmem>>, vector<2x256xf32>
    %151 = arith.addf %119, %150 : vector<2x256xf32>
    %cst_65 = arith.constant 0.000000e+00 : f32
    %152 = vector.broadcast %cst_65 : f32 to vector<2x256xf32>
    %153 = vector.extract_strided_slice %118 {offsets = [0, 7], sizes = [2, 1], strides = [1, 1]} : vector<2x49xf32> to vector<2x1xf32>
    %154 = vector.broadcast %153 : vector<2x1xf32> to vector<2x256xf32>
    %155 = arith.mulf %154, %66 : vector<2x256xf32>
    %156 = arith.addf %152, %155 : vector<2x256xf32>
    %157 = vector.extract_strided_slice %118 {offsets = [0, 8], sizes = [2, 1], strides = [1, 1]} : vector<2x49xf32> to vector<2x1xf32>
    %158 = vector.broadcast %157 : vector<2x1xf32> to vector<2x256xf32>
    %159 = arith.mulf %158, %76 : vector<2x256xf32>
    %160 = arith.addf %156, %159 : vector<2x256xf32>
    %161 = vector.extract_strided_slice %118 {offsets = [0, 9], sizes = [2, 1], strides = [1, 1]} : vector<2x49xf32> to vector<2x1xf32>
    %162 = vector.broadcast %161 : vector<2x1xf32> to vector<2x256xf32>
    %163 = arith.mulf %162, %86 : vector<2x256xf32>
    %164 = arith.addf %160, %163 : vector<2x256xf32>
    %165 = vector.extract_strided_slice %118 {offsets = [0, 10], sizes = [2, 1], strides = [1, 1]} : vector<2x49xf32> to vector<2x1xf32>
    %166 = vector.broadcast %165 : vector<2x1xf32> to vector<2x256xf32>
    %167 = arith.mulf %166, %87 : vector<2x256xf32>
    %168 = arith.addf %164, %167 : vector<2x256xf32>
    %169 = vector.extract_strided_slice %118 {offsets = [0, 11], sizes = [2, 1], strides = [1, 1]} : vector<2x49xf32> to vector<2x1xf32>
    %170 = vector.broadcast %169 : vector<2x1xf32> to vector<2x256xf32>
    %171 = arith.mulf %170, %97 : vector<2x256xf32>
    %172 = arith.addf %168, %171 : vector<2x256xf32>
    %173 = vector.extract_strided_slice %118 {offsets = [0, 12], sizes = [2, 1], strides = [1, 1]} : vector<2x49xf32> to vector<2x1xf32>
    %174 = vector.broadcast %173 : vector<2x1xf32> to vector<2x256xf32>
    %175 = arith.mulf %174, %107 : vector<2x256xf32>
    %176 = arith.addf %172, %175 : vector<2x256xf32>
    %177 = vector.extract_strided_slice %118 {offsets = [0, 13], sizes = [2, 1], strides = [1, 1]} : vector<2x49xf32> to vector<2x1xf32>
    %178 = vector.broadcast %177 : vector<2x1xf32> to vector<2x256xf32>
    %179 = arith.mulf %178, %117 : vector<2x256xf32>
    %180 = arith.addf %176, %179 : vector<2x256xf32>
    %c0_66 = arith.constant 0 : index
    %c128_67 = arith.constant 128 : index
    %181 = vector.load %arg12[%c0_66, %c128_67] : memref<2x432xf32, #tpu.memory_space<vmem>>, vector<2x256xf32>
    tpu.vector_store %arg12[%c0_66, %c128_67], %180 {strides = array<i32>} : memref<2x432xf32, #tpu.memory_space<vmem>>, vector<2x256xf32>,
    %c0_68 = arith.constant 0 : index
    %c96 = arith.constant 96 : index
    %182 = vector.load %arg12[%c0_68, %c96] : memref<2x432xf32, #tpu.memory_space<vmem>>, vector<2x256xf32>
    %183 = arith.addf %151, %182 : vector<2x256xf32>
    %cst_69 = arith.constant 0.000000e+00 : f32
    %184 = vector.broadcast %cst_69 : f32 to vector<2x256xf32>
    %185 = vector.extract_strided_slice %118 {offsets = [0, 14], sizes = [2, 1], strides = [1, 1]} : vector<2x49xf32> to vector<2x1xf32>
    %186 = vector.broadcast %185 : vector<2x1xf32> to vector<2x256xf32>
    %187 = arith.mulf %186, %66 : vector<2x256xf32>
    %188 = arith.addf %184, %187 : vector<2x256xf32>
    %189 = vector.extract_strided_slice %118 {offsets = [0, 15], sizes = [2, 1], strides = [1, 1]} : vector<2x49xf32> to vector<2x1xf32>
    %190 = vector.broadcast %189 : vector<2x1xf32> to vector<2x256xf32>
    %191 = arith.mulf %190, %76 : vector<2x256xf32>
    %192 = arith.addf %188, %191 : vector<2x256xf32>
    %193 = vector.extract_strided_slice %118 {offsets = [0, 16], sizes = [2, 1], strides = [1, 1]} : vector<2x49xf32> to vector<2x1xf32>
    %194 = vector.broadcast %193 : vector<2x1xf32> to vector<2x256xf32>
    %195 = arith.mulf %194, %86 : vector<2x256xf32>
    %196 = arith.addf %192, %195 : vector<2x256xf32>
    %197 = vector.extract_strided_slice %118 {offsets = [0, 17], sizes = [2, 1], strides = [1, 1]} : vector<2x49xf32> to vector<2x1xf32>
    %198 = vector.broadcast %197 : vector<2x1xf32> to vector<2x256xf32>
    %199 = arith.mulf %198, %87 : vector<2x256xf32>
    %200 = arith.addf %196, %199 : vector<2x256xf32>
    %201 = vector.extract_strided_slice %118 {offsets = [0, 18], sizes = [2, 1], strides = [1, 1]} : vector<2x49xf32> to vector<2x1xf32>
    %202 = vector.broadcast %201 : vector<2x1xf32> to vector<2x256xf32>
    %203 = arith.mulf %202, %97 : vector<2x256xf32>
    %204 = arith.addf %200, %203 : vector<2x256xf32>
    %205 = vector.extract_strided_slice %118 {offsets = [0, 19], sizes = [2, 1], strides = [1, 1]} : vector<2x49xf32> to vector<2x1xf32>
    %206 = vector.broadcast %205 : vector<2x1xf32> to vector<2x256xf32>
    %207 = arith.mulf %206, %107 : vector<2x256xf32>
    %208 = arith.addf %204, %207 : vector<2x256xf32>
    %209 = vector.extract_strided_slice %118 {offsets = [0, 20], sizes = [2, 1], strides = [1, 1]} : vector<2x49xf32> to vector<2x1xf32>
    %210 = vector.broadcast %209 : vector<2x1xf32> to vector<2x256xf32>
    %211 = arith.mulf %210, %117 : vector<2x256xf32>
    %212 = arith.addf %208, %211 : vector<2x256xf32>
    %c0_70 = arith.constant 0 : index
    %c128_71 = arith.constant 128 : index
    %213 = vector.load %arg12[%c0_70, %c128_71] : memref<2x432xf32, #tpu.memory_space<vmem>>, vector<2x256xf32>
    tpu.vector_store %arg12[%c0_70, %c128_71], %212 {strides = array<i32>} : memref<2x432xf32, #tpu.memory_space<vmem>>, vector<2x256xf32>,
    %c0_72 = arith.constant 0 : index
    %c112 = arith.constant 112 : index
    %214 = vector.load %arg12[%c0_72, %c112] : memref<2x432xf32, #tpu.memory_space<vmem>>, vector<2x256xf32>
    %215 = arith.addf %183, %214 : vector<2x256xf32>
    %cst_73 = arith.constant 0.000000e+00 : f32
    %216 = vector.broadcast %cst_73 : f32 to vector<2x256xf32>
    %217 = vector.extract_strided_slice %118 {offsets = [0, 21], sizes = [2, 1], strides = [1, 1]} : vector<2x49xf32> to vector<2x1xf32>
    %218 = vector.broadcast %217 : vector<2x1xf32> to vector<2x256xf32>
    %219 = arith.mulf %218, %66 : vector<2x256xf32>
    %220 = arith.addf %216, %219 : vector<2x256xf32>
    %221 = vector.extract_strided_slice %118 {offsets = [0, 22], sizes = [2, 1], strides = [1, 1]} : vector<2x49xf32> to vector<2x1xf32>
    %222 = vector.broadcast %221 : vector<2x1xf32> to vector<2x256xf32>
    %223 = arith.mulf %222, %76 : vector<2x256xf32>
    %224 = arith.addf %220, %223 : vector<2x256xf32>
    %225 = vector.extract_strided_slice %118 {offsets = [0, 23], sizes = [2, 1], strides = [1, 1]} : vector<2x49xf32> to vector<2x1xf32>
    %226 = vector.broadcast %225 : vector<2x1xf32> to vector<2x256xf32>
    %227 = arith.mulf %226, %86 : vector<2x256xf32>
    %228 = arith.addf %224, %227 : vector<2x256xf32>
    %229 = vector.extract_strided_slice %118 {offsets = [0, 24], sizes = [2, 1], strides = [1, 1]} : vector<2x49xf32> to vector<2x1xf32>
    %230 = vector.broadcast %229 : vector<2x1xf32> to vector<2x256xf32>
    %231 = arith.mulf %230, %87 : vector<2x256xf32>
    %232 = arith.addf %228, %231 : vector<2x256xf32>
    %233 = vector.extract_strided_slice %118 {offsets = [0, 25], sizes = [2, 1], strides = [1, 1]} : vector<2x49xf32> to vector<2x1xf32>
    %234 = vector.broadcast %233 : vector<2x1xf32> to vector<2x256xf32>
    %235 = arith.mulf %234, %97 : vector<2x256xf32>
    %236 = arith.addf %232, %235 : vector<2x256xf32>
    %237 = vector.extract_strided_slice %118 {offsets = [0, 26], sizes = [2, 1], strides = [1, 1]} : vector<2x49xf32> to vector<2x1xf32>
    %238 = vector.broadcast %237 : vector<2x1xf32> to vector<2x256xf32>
    %239 = arith.mulf %238, %107 : vector<2x256xf32>
    %240 = arith.addf %236, %239 : vector<2x256xf32>
    %241 = vector.extract_strided_slice %118 {offsets = [0, 27], sizes = [2, 1], strides = [1, 1]} : vector<2x49xf32> to vector<2x1xf32>
    %242 = vector.broadcast %241 : vector<2x1xf32> to vector<2x256xf32>
    %243 = arith.mulf %242, %117 : vector<2x256xf32>
    %244 = arith.addf %240, %243 : vector<2x256xf32>
    %245 = arith.addf %215, %244 : vector<2x256xf32>
    %cst_74 = arith.constant 0.000000e+00 : f32
    %246 = vector.broadcast %cst_74 : f32 to vector<2x256xf32>
    %247 = vector.extract_strided_slice %118 {offsets = [0, 28], sizes = [2, 1], strides = [1, 1]} : vector<2x49xf32> to vector<2x1xf32>
    %248 = vector.broadcast %247 : vector<2x1xf32> to vector<2x256xf32>
    %249 = arith.mulf %248, %66 : vector<2x256xf32>
    %250 = arith.addf %246, %249 : vector<2x256xf32>
    %251 = vector.extract_strided_slice %118 {offsets = [0, 29], sizes = [2, 1], strides = [1, 1]} : vector<2x49xf32> to vector<2x1xf32>
    %252 = vector.broadcast %251 : vector<2x1xf32> to vector<2x256xf32>
    %253 = arith.mulf %252, %76 : vector<2x256xf32>
    %254 = arith.addf %250, %253 : vector<2x256xf32>
    %255 = vector.extract_strided_slice %118 {offsets = [0, 30], sizes = [2, 1], strides = [1, 1]} : vector<2x49xf32> to vector<2x1xf32>
    %256 = vector.broadcast %255 : vector<2x1xf32> to vector<2x256xf32>
    %257 = arith.mulf %256, %86 : vector<2x256xf32>
    %258 = arith.addf %254, %257 : vector<2x256xf32>
    %259 = vector.extract_strided_slice %118 {offsets = [0, 31], sizes = [2, 1], strides = [1, 1]} : vector<2x49xf32> to vector<2x1xf32>
    %260 = vector.broadcast %259 : vector<2x1xf32> to vector<2x256xf32>
    %261 = arith.mulf %260, %87 : vector<2x256xf32>
    %262 = arith.addf %258, %261 : vector<2x256xf32>
    %263 = vector.extract_strided_slice %118 {offsets = [0, 32], sizes = [2, 1], strides = [1, 1]} : vector<2x49xf32> to vector<2x1xf32>
    %264 = vector.broadcast %263 : vector<2x1xf32> to vector<2x256xf32>
    %265 = arith.mulf %264, %97 : vector<2x256xf32>
    %266 = arith.addf %262, %265 : vector<2x256xf32>
    %267 = vector.extract_strided_slice %118 {offsets = [0, 33], sizes = [2, 1], strides = [1, 1]} : vector<2x49xf32> to vector<2x1xf32>
    %268 = vector.broadcast %267 : vector<2x1xf32> to vector<2x256xf32>
    %269 = arith.mulf %268, %107 : vector<2x256xf32>
    %270 = arith.addf %266, %269 : vector<2x256xf32>
    %271 = vector.extract_strided_slice %118 {offsets = [0, 34], sizes = [2, 1], strides = [1, 1]} : vector<2x49xf32> to vector<2x1xf32>
    %272 = vector.broadcast %271 : vector<2x1xf32> to vector<2x256xf32>
    %273 = arith.mulf %272, %117 : vector<2x256xf32>
    %274 = arith.addf %270, %273 : vector<2x256xf32>
    %c0_75 = arith.constant 0 : index
    %c128_76 = arith.constant 128 : index
    %275 = vector.load %arg12[%c0_75, %c128_76] : memref<2x432xf32, #tpu.memory_space<vmem>>, vector<2x256xf32>
    tpu.vector_store %arg12[%c0_75, %c128_76], %274 {strides = array<i32>} : memref<2x432xf32, #tpu.memory_space<vmem>>, vector<2x256xf32>,
    %c0_77 = arith.constant 0 : index
    %c144 = arith.constant 144 : index
    %276 = vector.load %arg12[%c0_77, %c144] : memref<2x432xf32, #tpu.memory_space<vmem>>, vector<2x256xf32>
    %277 = arith.addf %245, %276 : vector<2x256xf32>
    %cst_78 = arith.constant 0.000000e+00 : f32
    %278 = vector.broadcast %cst_78 : f32 to vector<2x256xf32>
    %279 = vector.extract_strided_slice %118 {offsets = [0, 35], sizes = [2, 1], strides = [1, 1]} : vector<2x49xf32> to vector<2x1xf32>
    %280 = vector.broadcast %279 : vector<2x1xf32> to vector<2x256xf32>
    %281 = arith.mulf %280, %66 : vector<2x256xf32>
    %282 = arith.addf %278, %281 : vector<2x256xf32>
    %283 = vector.extract_strided_slice %118 {offsets = [0, 36], sizes = [2, 1], strides = [1, 1]} : vector<2x49xf32> to vector<2x1xf32>
    %284 = vector.broadcast %283 : vector<2x1xf32> to vector<2x256xf32>
    %285 = arith.mulf %284, %76 : vector<2x256xf32>
    %286 = arith.addf %282, %285 : vector<2x256xf32>
    %287 = vector.extract_strided_slice %118 {offsets = [0, 37], sizes = [2, 1], strides = [1, 1]} : vector<2x49xf32> to vector<2x1xf32>
    %288 = vector.broadcast %287 : vector<2x1xf32> to vector<2x256xf32>
    %289 = arith.mulf %288, %86 : vector<2x256xf32>
    %290 = arith.addf %286, %289 : vector<2x256xf32>
    %291 = vector.extract_strided_slice %118 {offsets = [0, 38], sizes = [2, 1], strides = [1, 1]} : vector<2x49xf32> to vector<2x1xf32>
    %292 = vector.broadcast %291 : vector<2x1xf32> to vector<2x256xf32>
    %293 = arith.mulf %292, %87 : vector<2x256xf32>
    %294 = arith.addf %290, %293 : vector<2x256xf32>
    %295 = vector.extract_strided_slice %118 {offsets = [0, 39], sizes = [2, 1], strides = [1, 1]} : vector<2x49xf32> to vector<2x1xf32>
    %296 = vector.broadcast %295 : vector<2x1xf32> to vector<2x256xf32>
    %297 = arith.mulf %296, %97 : vector<2x256xf32>
    %298 = arith.addf %294, %297 : vector<2x256xf32>
    %299 = vector.extract_strided_slice %118 {offsets = [0, 40], sizes = [2, 1], strides = [1, 1]} : vector<2x49xf32> to vector<2x1xf32>
    %300 = vector.broadcast %299 : vector<2x1xf32> to vector<2x256xf32>
    %301 = arith.mulf %300, %107 : vector<2x256xf32>
    %302 = arith.addf %298, %301 : vector<2x256xf32>
    %303 = vector.extract_strided_slice %118 {offsets = [0, 41], sizes = [2, 1], strides = [1, 1]} : vector<2x49xf32> to vector<2x1xf32>
    %304 = vector.broadcast %303 : vector<2x1xf32> to vector<2x256xf32>
    %305 = arith.mulf %304, %117 : vector<2x256xf32>
    %306 = arith.addf %302, %305 : vector<2x256xf32>
    %c0_79 = arith.constant 0 : index
    %c128_80 = arith.constant 128 : index
    %307 = vector.load %arg12[%c0_79, %c128_80] : memref<2x432xf32, #tpu.memory_space<vmem>>, vector<2x256xf32>
    tpu.vector_store %arg12[%c0_79, %c128_80], %306 {strides = array<i32>} : memref<2x432xf32, #tpu.memory_space<vmem>>, vector<2x256xf32>,
    %c0_81 = arith.constant 0 : index
    %c160 = arith.constant 160 : index
    %308 = vector.load %arg12[%c0_81, %c160] : memref<2x432xf32, #tpu.memory_space<vmem>>, vector<2x256xf32>
    %309 = arith.addf %277, %308 : vector<2x256xf32>
    %cst_82 = arith.constant 0.000000e+00 : f32
    %310 = vector.broadcast %cst_82 : f32 to vector<2x256xf32>
    %311 = vector.extract_strided_slice %118 {offsets = [0, 42], sizes = [2, 1], strides = [1, 1]} : vector<2x49xf32> to vector<2x1xf32>
    %312 = vector.broadcast %311 : vector<2x1xf32> to vector<2x256xf32>
    %313 = arith.mulf %312, %66 : vector<2x256xf32>
    %314 = arith.addf %310, %313 : vector<2x256xf32>
    %315 = vector.extract_strided_slice %118 {offsets = [0, 43], sizes = [2, 1], strides = [1, 1]} : vector<2x49xf32> to vector<2x1xf32>
    %316 = vector.broadcast %315 : vector<2x1xf32> to vector<2x256xf32>
    %317 = arith.mulf %316, %76 : vector<2x256xf32>
    %318 = arith.addf %314, %317 : vector<2x256xf32>
    %319 = vector.extract_strided_slice %118 {offsets = [0, 44], sizes = [2, 1], strides = [1, 1]} : vector<2x49xf32> to vector<2x1xf32>
    %320 = vector.broadcast %319 : vector<2x1xf32> to vector<2x256xf32>
    %321 = arith.mulf %320, %86 : vector<2x256xf32>
    %322 = arith.addf %318, %321 : vector<2x256xf32>
    %323 = vector.extract_strided_slice %118 {offsets = [0, 45], sizes = [2, 1], strides = [1, 1]} : vector<2x49xf32> to vector<2x1xf32>
    %324 = vector.broadcast %323 : vector<2x1xf32> to vector<2x256xf32>
    %325 = arith.mulf %324, %87 : vector<2x256xf32>
    %326 = arith.addf %322, %325 : vector<2x256xf32>
    %327 = vector.extract_strided_slice %118 {offsets = [0, 46], sizes = [2, 1], strides = [1, 1]} : vector<2x49xf32> to vector<2x1xf32>
    %328 = vector.broadcast %327 : vector<2x1xf32> to vector<2x256xf32>
    %329 = arith.mulf %328, %97 : vector<2x256xf32>
    %330 = arith.addf %326, %329 : vector<2x256xf32>
    %331 = vector.extract_strided_slice %118 {offsets = [0, 47], sizes = [2, 1], strides = [1, 1]} : vector<2x49xf32> to vector<2x1xf32>
    %332 = vector.broadcast %331 : vector<2x1xf32> to vector<2x256xf32>
    %333 = arith.mulf %332, %107 : vector<2x256xf32>
    %334 = arith.addf %330, %333 : vector<2x256xf32>
    %335 = vector.extract_strided_slice %118 {offsets = [0, 48], sizes = [2, 1], strides = [1, 1]} : vector<2x49xf32> to vector<2x1xf32>
    %336 = vector.broadcast %335 : vector<2x1xf32> to vector<2x256xf32>
    %337 = arith.mulf %336, %117 : vector<2x256xf32>
    %338 = arith.addf %334, %337 : vector<2x256xf32>
    %c0_83 = arith.constant 0 : index
    %c128_84 = arith.constant 128 : index
    %339 = vector.load %arg12[%c0_83, %c128_84] : memref<2x432xf32, #tpu.memory_space<vmem>>, vector<2x256xf32>
    tpu.vector_store %arg12[%c0_83, %c128_84], %338 {strides = array<i32>} : memref<2x432xf32, #tpu.memory_space<vmem>>, vector<2x256xf32>,
    %c0_85 = arith.constant 0 : index
    %c176 = arith.constant 176 : index
    %340 = vector.load %arg12[%c0_85, %c176] : memref<2x432xf32, #tpu.memory_space<vmem>>, vector<2x256xf32>
    %341 = arith.addf %309, %340 : vector<2x256xf32>
    %342 = vector.extract_strided_slice %341 {offsets = [0, 0], sizes = [1, 256], strides = [1, 1]} : vector<2x256xf32> to vector<1x256xf32>
    %343 = vector.extract_strided_slice %341 {offsets = [1, 0], sizes = [1, 256], strides = [1, 1]} : vector<2x256xf32> to vector<1x256xf32>
    %344 = arith.addf %342, %343 : vector<1x256xf32>
    %c0_86 = arith.constant 0 : index
    %345 = memref.load %arg8[%c0_86] : memref<2xf32, #tpu.memory_space<smem>>
    %346 = vector.broadcast %345 : f32 to vector<1x256xf32>
    %347 = arith.mulf %344, %346 : vector<1x256xf32>
    %c1_87 = arith.constant 1 : index
    %348 = memref.load %arg8[%c1_87] : memref<2xf32, #tpu.memory_space<smem>>
    %349 = vector.broadcast %348 : f32 to vector<1x256xf32>
    %350 = arith.addf %347, %349 : vector<1x256xf32>
    %351 = arith.negf %350 : vector<1x256xf32>
    %352 = math.exp %351 : vector<1x256xf32>
    %cst_88 = arith.constant 1.000000e+00 : f32
    %353 = vector.broadcast %cst_88 : f32 to vector<1x256xf32>
    %354 = arith.addf %353, %352 : vector<1x256xf32>
    %355 = arith.divf %353, %354 : vector<1x256xf32>
    %c0_89 = arith.constant 0 : index
    %c0_90 = arith.constant 0 : index
    %c0_91 = arith.constant 0 : index
    %356 = vector.load %arg1[%c0_89, %c0_90, %c0_91] : memref<1x32x256xf32, #tpu.memory_space<vmem>>, vector<1x32x256xf32>
    %357 = vector.shape_cast %356 : vector<1x32x256xf32> to vector<32x256xf32>
    %358 = vector.broadcast %46 : vector<32x1xf32> to vector<32x256xf32>
    %359 = arith.mulf %357, %358 : vector<32x256xf32>
    %c0_92 = arith.constant 0 : index
    %c0_93 = arith.constant 0 : index
    %c0_94 = arith.constant 0 : index
    %360 = vector.load %arg9[%c0_92, %c0_93, %c0_94] : memref<1x32x256xf32, #tpu.memory_space<vmem>>, vector<1x32x256xf32>
    %361 = vector.shape_cast %360 : vector<1x32x256xf32> to vector<32x256xf32>
    %362 = vector.shape_cast %359 : vector<32x256xf32> to vector<1x32x256xf32>
    tpu.vector_store %arg9[%c0_92, %c0_93, %c0_94], %362 {strides = array<i32>} : memref<1x32x256xf32, #tpu.memory_space<vmem>>, vector<1x32x256xf32>,
    %c0_95 = arith.constant 0 : index
    %c0_96 = arith.constant 0 : index
    %c0_97 = arith.constant 0 : index
    %363 = vector.load %arg2[%c0_95, %c0_96, %c0_97] : memref<1x32x256xf32, #tpu.memory_space<vmem>>, vector<1x32x256xf32>
    %364 = vector.shape_cast %363 : vector<1x32x256xf32> to vector<32x256xf32>
    %365 = vector.broadcast %355 : vector<1x256xf32> to vector<32x256xf32>
    %366 = arith.mulf %364, %365 : vector<32x256xf32>
    %c0_98 = arith.constant 0 : index
    %c0_99 = arith.constant 0 : index
    %c0_100 = arith.constant 0 : index
    %367 = vector.load %arg10[%c0_98, %c0_99, %c0_100] : memref<1x32x256xf32, #tpu.memory_space<vmem>>, vector<1x32x256xf32>
    %368 = vector.shape_cast %367 : vector<1x32x256xf32> to vector<32x256xf32>
    %369 = vector.shape_cast %366 : vector<32x256xf32> to vector<1x32x256xf32>
    tpu.vector_store %arg10[%c0_98, %c0_99, %c0_100], %369 {strides = array<i32>} : memref<1x32x256xf32, #tpu.memory_space<vmem>>, vector<1x32x256xf32>,
    return
  }
  func.func @transform_0(%arg0: i32) -> (i32, i32, i32) {
    %c0_i32 = arith.constant 0 : i32
    %c0_i32_0 = arith.constant 0 : i32
    %c0_i32_1 = arith.constant 0 : i32
    return %arg0, %c0_i32, %c0_i32_0 : i32, i32, i32
  }
  func.func @transform_1(%arg0: i32) -> (i32, i32, i32) {
    %c0_i32 = arith.constant 0 : i32
    %c0_i32_0 = arith.constant 0 : i32
    %c0_i32_1 = arith.constant 0 : i32
    return %arg0, %c0_i32, %c0_i32_0 : i32, i32, i32
  }
  func.func @transform_2(%arg0: i32) -> (i32, i32) {
    %c0_i32 = arith.constant 0 : i32
    %c0_i32_0 = arith.constant 0 : i32
    %c0_i32_1 = arith.constant 0 : i32
    return %c0_i32, %c0_i32_0 : i32, i32
  }
  func.func @transform_3(%arg0: i32) -> (i32, i32) {
    %c0_i32 = arith.constant 0 : i32
    %c0_i32_0 = arith.constant 0 : i32
    %c0_i32_1 = arith.constant 0 : i32
    return %c0_i32, %c0_i32_0 : i32, i32
  }
  func.func @transform_4(%arg0: i32) -> (i32, i32) {
    %c0_i32 = arith.constant 0 : i32
    %c0_i32_0 = arith.constant 0 : i32
    %c0_i32_1 = arith.constant 0 : i32
    return %c0_i32, %c0_i32_0 : i32, i32
  }
  func.func @transform_5(%arg0: i32) -> (i32, i32) {
    %c0_i32 = arith.constant 0 : i32
    %c0_i32_0 = arith.constant 0 : i32
    %c0_i32_1 = arith.constant 0 : i32
    return %c0_i32, %c0_i32_0 : i32, i32
  }
  func.func @transform_6(%arg0: i32) -> (i32, i32) {
    %c0_i32 = arith.constant 0 : i32
    %c0_i32_0 = arith.constant 0 : i32
    %c0_i32_1 = arith.constant 0 : i32
    return %c0_i32, %c0_i32_0 : i32, i32
  }
  func.func @transform_7(%arg0: i32) -> i32 {
    %c0_i32 = arith.constant 0 : i32
    %c0_i32_0 = arith.constant 0 : i32
    return %c0_i32 : i32
  }
  func.func @transform_8(%arg0: i32) -> (i32, i32, i32) {
    %c0_i32 = arith.constant 0 : i32
    %c0_i32_0 = arith.constant 0 : i32
    %c0_i32_1 = arith.constant 0 : i32
    return %arg0, %c0_i32, %c0_i32_0 : i32, i32, i32
  }
  func.func @transform_9(%arg0: i32) -> (i32, i32, i32) {
    %c0_i32 = arith.constant 0 : i32
    %c0_i32_0 = arith.constant 0 : i32
    %c0_i32_1 = arith.constant 0 : i32
    return %arg0, %c0_i32, %c0_i32_0 : i32, i32, i32
  }
}

</mosaic_0001>

<llo_original>
// kernel: tpu_custom_call.1
$region0: #{tpu_custom_call.1}
  #allocation0 [shape = 'u32[]', space=smem, size = 0x4, offset = 0x4, fixed_abs, tag = 'smem constant byte address 0x4 - core index']
  #allocation1 [shape = 'u32[144,128]{1,0:T(1,128)}', space=vmem, size = 0x12000, scoped, tag = 'internal scratch']
  #allocation2 [shape = 'f32[2,387]{1,0:T(2,128)}', space=vmem, size = 0x1000, scoped, tag = 'scratch operand']
  #allocation3 [shape = 'f32[2,432]{1,0:T(2,128)}', space=vmem, size = 0x1000, scoped, tag = 'scratch operand']
  %s0 = inlined_call_operand.hbm [shape: f32[2,32,256], index: 0, kind: input, shape index: {}]
  %s1 = inlined_call_operand.hbm [shape: f32[2,32,256], index: 1, kind: input, shape index: {}]
  %s2 = inlined_call_operand.vmem [shape: f32[2,32], index: 2, kind: input, shape index: {}]
  %s3 = inlined_call_operand.vmem [shape: f32[2,1], index: 3, kind: input, shape index: {}]
  %s4 = inlined_call_operand.vmem [shape: f32[32,2], index: 4, kind: input, shape index: {}]
  %s5 = inlined_call_operand.vmem [shape: f32[32,1], index: 5, kind: input, shape index: {}]
  %s6 = inlined_call_operand.vmem [shape: f32[2,49], index: 6, kind: input, shape index: {}]
  %s7 = inlined_call_operand.vmem [shape: f32[2], index: 7, kind: input, shape index: {}]
  %s8 = inlined_call_operand.hbm [shape: f32[2,32,256], index: 8, kind: output, shape index: {0}]
  %s9 = inlined_call_operand.hbm [shape: f32[2,32,256], index: 9, kind: output, shape index: {1}]
  %10 = xla_tuple %s8, %s9
  %s11 = sld [smem:[#allocation0]]
  $region85: #{tpu_custom_call.1} parent=0
    _
  %s13 = ssub.s32 1, %s11
  %s14 = scalar_select 0, %s13, %s11
  $region1: #{tpu_custom_call.1} parent=0
    #allocation4 [shape = 'u8[65536]{0}', space=vmem, size = 0x10000, scoped, tag = 'input window, operand 0']
    #allocation5 [shape = 's32[2]{0}', space=sflag, size = 0x8, scoped, tag = 'scoped memory for tpu_custom_call.1']
    #allocation6 [shape = 's32[2]{0}', space=sflag, size = 0x8, scoped, tag = 'scoped memory for tpu_custom_call.1']
    #allocation7 [shape = 's32[2]{0}', space=sflag, size = 0x8, scoped, tag = 'scoped memory for tpu_custom_call.1']
    #allocation8 [shape = 'u8[65536]{0}', space=vmem, size = 0x10000, scoped, tag = 'input window, operand 1']
    #allocation9 [shape = 's32[2]{0}', space=sflag, size = 0x8, scoped, tag = 'scoped memory for tpu_custom_call.1']
    #allocation10 [shape = 'u8[512]{0}', space=smem, size = 0x200, scoped, tag = 'input window, operand 7, single buffered']
    #allocation11 [shape = 'u8[65536]{0}', space=vmem, size = 0x10000, scoped, tag = 'output window, operand 0']
    #allocation12 [shape = 'u8[65536]{0}', space=vmem, size = 0x10000, scoped, tag = 'output window, operand 1']
    #allocation13 [shape = 's32[2]{0}', space=sflag, size = 0x8, scoped, tag = 'scoped memory for tpu_custom_call.1']
    %15 = vsyncpa [#allocation5], 0
    %s16 = scalar_lea.sflag [#allocation5], 1
    %17 = vsyncpa %s16, 0
    %18 = vsyncpa [#allocation9], 0
    %s19 = scalar_lea.sflag [#allocation9], 1
    %20 = vsyncpa %s19, 0
    %21 = vsyncpa [#allocation7], 0
    %22 = vsyncpa [#allocation6], 0
    %s23 = scalar_lea.sflag [#allocation6], 1
    %24 = vsyncpa %s23, 0
    %25 = vsyncpa [#allocation13], 0
    %s26 = scalar_lea.sflag [#allocation13], 1
    %27 = vsyncpa %s26, 0
    loop: start=0, step=1, limit=4
    $region2: #{tpu_custom_call.1} parent=1 // loop_pre_header
      _
    $region3: #{tpu_custom_call.1} parent=1 // loop_header
      %s29 = sphi 0, %s33
      %p30 = scmp.ge.s32.totalorder %s29, 4
      %s39 = sphi 0, %s41
      %s42 = sphi 0, %s39
      %s43 = sphi 0, %s42
      %s59 = sphi 0, %s43
      %s65 = sphi 0, %s67
      %s68 = sphi 0, %s65
      %s69 = sphi 0, %s68
      %s85 = sphi 0, %s69
      %s89 = sphi 0, %s89
      %s91 = sphi 0, %s89
      %s92 = sphi 0, %s91
      %s106 = sphi 0, %s92
      %s110 = sphi 0, %s110
      %s112 = sphi 0, %s110
      %s113 = sphi 0, %s112
      %s127 = sphi 0, %s113
      %s131 = sphi 0, %s131
      %s133 = sphi 0, %s131
      %s134 = sphi 0, %s133
      %s148 = sphi 0, %s134
      %s152 = sphi 0, %s152
      %s154 = sphi 0, %s152
      %s155 = sphi 0, %s154
      %s169 = sphi 0, %s155
      %s173 = sphi 0, %s173
      %s175 = sphi 0, %s173
      %s176 = sphi 0, %s175
      %s190 = sphi 0, %s176
      %s194 = sphi 0, %s194
      %s196 = sphi 0, %s194
      %s197 = sphi 0, %s196
      %s211 = sphi 0, %s197
      %s217 = sphi 0, %s219
      %s220 = sphi 0, %s217
      %s221 = sphi 0, %s220
      %s237 = sphi 0, %s221
      %s243 = sphi 0, %s245
      %s246 = sphi 0, %s243
      %s247 = sphi 0, %s246
      %s263 = sphi 0, %s247
    $region4: #{tpu_custom_call.1} parent=1 // loop_header_branch
      %32 = sbr.rel (%p30) target = $region8
    $region5: #{tpu_custom_call.1} parent=1 // loop_body
      %s34 = ssub.s32 %s29, 1
      %s35 = ssub.s32 %s29, 2
      %s36 = sadd.s32 %s29, 1
      %s37 = ssub.s32 %s29, %s36
      %p38 = scmp.eq.s32.totalorder %s37, 0
      %s40 = sadd.s32 %s39, 1
      %s41 = scalar_select %p38, %s39, %s40
      %p44 = pneg %p38
      %p45 = scmp.eq.s32.totalorder %s29, 1
      %p46 = por %p44, %p45
      %p47 = scmp.ne.s32.totalorder %s39, %s42
      %p48 = scmp.eq.s32.totalorder %s29, 0
      %p49 = por %p47, %p48
      %p50 = scmp.ne.s32.totalorder %s39, %s42
      %p51 = scmp.eq.s32.totalorder %s34, 1
      %p52 = por %p50, %p51
      %p53 = scmp.ne.s32.totalorder %s42, %s43
      %p54 = scmp.eq.s32.totalorder %s34, 0
      %p55 = por %p53, %p54
      %p56 = scmp.ne.s32.totalorder %s42, %s43
      %p57 = scmp.eq.s32.totalorder %s35, 1
      %p58 = por %p56, %p57
      %p60 = scmp.ne.s32.totalorder %s43, %s59
      %p61 = scmp.eq.s32.totalorder %s35, 0
      %p62 = por %p60, %p61
      %s63 = ssub.s32 %s29, %s36
      %p64 = scmp.eq.s32.totalorder %s63, 0
      %s66 = sadd.s32 %s65, 1
      %s67 = scalar_select %p64, %s65, %s66
      %p70 = pneg %p64
      %p71 = scmp.eq.s32.totalorder %s29, 1
      %p72 = por %p70, %p71
      %p73 = scmp.ne.s32.totalorder %s65, %s68
      %p74 = scmp.eq.s32.totalorder %s29, 0
      %p75 = por %p73, %p74
      %p76 = scmp.ne.s32.totalorder %s65, %s68
      %p77 = scmp.eq.s32.totalorder %s34, 1
      %p78 = por %p76, %p77
      %p79 = scmp.ne.s32.totalorder %s68, %s69
      %p80 = scmp.eq.s32.totalorder %s34, 0
      %p81 = por %p79, %p80
      %p82 = scmp.ne.s32.totalorder %s68, %s69
      %p83 = scmp.eq.s32.totalorder %s35, 1
      %p84 = por %p82, %p83
      %p86 = scmp.ne.s32.totalorder %s69, %s85
      %p87 = scmp.eq.s32.totalorder %s35, 0
      %p88 = por %p86, %p87
      %s90 = sadd.s32 %s89, 1
      %p93 = scmp.eq.s32.totalorder %s29, 1
      %p94 = scmp.ne.s32.totalorder %s89, %s91
      %p95 = scmp.eq.s32.totalorder %s29, 0
      %p96 = por %p94, %p95
      %p97 = scmp.ne.s32.totalorder %s89, %s91
      %p98 = scmp.eq.s32.totalorder %s34, 1
      %p99 = por %p97, %p98
      %p100 = scmp.ne.s32.totalorder %s91, %s92
      %p101 = scmp.eq.s32.totalorder %s34, 0
      %p102 = por %p100, %p101
      %p103 = scmp.ne.s32.totalorder %s91, %s92
      %p104 = scmp.eq.s32.totalorder %s35, 1
      %p105 = por %p103, %p104
      %p107 = scmp.ne.s32.totalorder %s92, %s106
      %p108 = scmp.eq.s32.totalorder %s35, 0
      %p109 = por %p107, %p108
      %s111 = sadd.s32 %s110, 1
      %p114 = scmp.eq.s32.totalorder %s29, 1
      %p115 = scmp.ne.s32.totalorder %s110, %s112
      %p116 = scmp.eq.s32.totalorder %s29, 0
      %p117 = por %p115, %p116
      %p118 = scmp.ne.s32.totalorder %s110, %s112
      %p119 = scmp.eq.s32.totalorder %s34, 1
      %p120 = por %p118, %p119
      %p121 = scmp.ne.s32.totalorder %s112, %s113
      %p122 = scmp.eq.s32.totalorder %s34, 0
      %p123 = por %p121, %p122
      %p124 = scmp.ne.s32.totalorder %s112, %s113
      %p125 = scmp.eq.s32.totalorder %s35, 1
      %p126 = por %p124, %p125
      %p128 = scmp.ne.s32.totalorder %s113, %s127
      %p129 = scmp.eq.s32.totalorder %s35, 0
      %p130 = por %p128, %p129
      %s132 = sadd.s32 %s131, 1
      %p135 = scmp.eq.s32.totalorder %s29, 1
      %p136 = scmp.ne.s32.totalorder %s131, %s133
      %p137 = scmp.eq.s32.totalorder %s29, 0
      %p138 = por %p136, %p137
      %p139 = scmp.ne.s32.totalorder %s131, %s133
      %p140 = scmp.eq.s32.totalorder %s34, 1
      %p141 = por %p139, %p140
      %p142 = scmp.ne.s32.totalorder %s133, %s134
      %p143 = scmp.eq.s32.totalorder %s34, 0
      %p144 = por %p142, %p143
      %p145 = scmp.ne.s32.totalorder %s133, %s134
      %p146 = scmp.eq.s32.totalorder %s35, 1
      %p147 = por %p145, %p146
      %p149 = scmp.ne.s32.totalorder %s134, %s148
      %p150 = scmp.eq.s32.totalorder %s35, 0
      %p151 = por %p149, %p150
      %s153 = sadd.s32 %s152, 1
      %p156 = scmp.eq.s32.totalorder %s29, 1
      %p157 = scmp.ne.s32.totalorder %s152, %s154
      %p158 = scmp.eq.s32.totalorder %s29, 0
      %p159 = por %p157, %p158
      %p160 = scmp.ne.s32.totalorder %s152, %s154
      %p161 = scmp.eq.s32.totalorder %s34, 1
      %p162 = por %p160, %p161
      %p163 = scmp.ne.s32.totalorder %s154, %s155
      %p164 = scmp.eq.s32.totalorder %s34, 0
      %p165 = por %p163, %p164
      %p166 = scmp.ne.s32.totalorder %s154, %s155
      %p167 = scmp.eq.s32.totalorder %s35, 1
      %p168 = por %p166, %p167
      %p170 = scmp.ne.s32.totalorder %s155, %s169
      %p171 = scmp.eq.s32.totalorder %s35, 0
      %p172 = por %p170, %p171
      %s174 = sadd.s32 %s173, 1
      %p177 = scmp.eq.s32.totalorder %s29, 1
      %p178 = scmp.ne.s32.totalorder %s173, %s175
      %p179 = scmp.eq.s32.totalorder %s29, 0
      %p180 = por %p178, %p179
      %p181 = scmp.ne.s32.totalorder %s173, %s175
      %p182 = scmp.eq.s32.totalorder %s34, 1
      %p183 = por %p181, %p182
      %p184 = scmp.ne.s32.totalorder %s175, %s176
      %p185 = scmp.eq.s32.totalorder %s34, 0
      %p186 = por %p184, %p185
      %p187 = scmp.ne.s32.totalorder %s175, %s176
      %p188 = scmp.eq.s32.totalorder %s35, 1
      %p189 = por %p187, %p188
      %p191 = scmp.ne.s32.totalorder %s176, %s190
      %p192 = scmp.eq.s32.totalorder %s35, 0
      %p193 = por %p191, %p192
      %s195 = sadd.s32 %s194, 1
      %p198 = scmp.eq.s32.totalorder %s29, 1
      %p199 = scmp.ne.s32.totalorder %s194, %s196
      %p200 = scmp.eq.s32.totalorder %s29, 0
      %p201 = por %p199, %p200
      %p202 = scmp.ne.s32.totalorder %s194, %s196
      %p203 = scmp.eq.s32.totalorder %s34, 1
      %p204 = por %p202, %p203
      %p205 = scmp.ne.s32.totalorder %s196, %s197
      %p206 = scmp.eq.s32.totalorder %s34, 0
      %p207 = por %p205, %p206
      %p208 = scmp.ne.s32.totalorder %s196, %s197
      %p209 = scmp.eq.s32.totalorder %s35, 1
      %p210 = por %p208, %p209
      %p212 = scmp.ne.s32.totalorder %s197, %s211
      %p213 = scmp.eq.s32.totalorder %s35, 0
      %p214 = por %p212, %p213
      %s215 = ssub.s32 %s29, %s36
      %p216 = scmp.eq.s32.totalorder %s215, 0
      %s218 = sadd.s32 %s217, 1
      %s219 = scalar_select %p216, %s217, %s218
      %p222 = pneg %p216
      %p223 = scmp.eq.s32.totalorder %s29, 1
      %p224 = por %p222, %p223
      %p225 = scmp.ne.s32.totalorder %s217, %s220
      %p226 = scmp.eq.s32.totalorder %s29, 0
      %p227 = por %p225, %p226
      %p228 = scmp.ne.s32.totalorder %s217, %s220
      %p229 = scmp.eq.s32.totalorder %s34, 1
      %p230 = por %p228, %p229
      %p231 = scmp.ne.s32.totalorder %s220, %s221
      %p232 = scmp.eq.s32.totalorder %s34, 0
      %p233 = por %p231, %p232
      %p234 = scmp.ne.s32.totalorder %s220, %s221
      %p235 = scmp.eq.s32.totalorder %s35, 1
      %p236 = por %p234, %p235
      %p238 = scmp.ne.s32.totalorder %s221, %s237
      %p239 = scmp.eq.s32.totalorder %s35, 0
      %p240 = por %p238, %p239
      %s241 = ssub.s32 %s29, %s36
      %p242 = scmp.eq.s32.totalorder %s241, 0
      %s244 = sadd.s32 %s243, 1
      %s245 = scalar_select %p242, %s243, %s244
      %p248 = pneg %p242
      %p249 = scmp.eq.s32.totalorder %s29, 1
      %p250 = por %p248, %p249
      %p251 = scmp.ne.s32.totalorder %s243, %s246
      %p252 = scmp.eq.s32.totalorder %s29, 0
      %p253 = por %p251, %p252
      %p254 = scmp.ne.s32.totalorder %s243, %s246
      %p255 = scmp.eq.s32.totalorder %s34, 1
      %p256 = por %p254, %p255
      %p257 = scmp.ne.s32.totalorder %s246, %s247
      %p258 = scmp.eq.s32.totalorder %s34, 0
      %p259 = por %p257, %p258
      %p260 = scmp.ne.s32.totalorder %s246, %s247
      %p261 = scmp.eq.s32.totalorder %s35, 1
      %p262 = por %p260, %p261
      %p264 = scmp.ne.s32.totalorder %s247, %s263
      %p265 = scmp.eq.s32.totalorder %s35, 0
      %p266 = por %p264, %p265
      %p267 = scmp.le.s32.totalorder 1, %s29
      %p268 = scmp.lt.s32.totalorder %s29, 3
      %p269 = pnand %p267, %p268
      %p270 = pneg %p269
      // Predicated region
      $region9: #{tpu_custom_call.1} parent=5 // pred_check
        _
      $region10: #{tpu_custom_call.1} parent=5 // pred_check_branch
        %272 = sbr.rel (%p269) target = $region12
      $region11: #{tpu_custom_call.1} parent=5 // pred_region
        %s273 = ssub.s32 %s29, 1
        // Predicated region
        $region13: #{tpu_custom_call.1} parent=11 // pred_check
          %p274 = pneg %p102
        $region14: #{tpu_custom_call.1} parent=11 // pred_check_branch
          %276 = sbr.rel (%p274) target = $region16
        $region15: #{tpu_custom_call.1} parent=11 // pred_region
          _
        $region16: #{tpu_custom_call.1} parent=11 // pred_fallthru
          _
        // Predicated region
        $region17: #{tpu_custom_call.1} parent=11 // pred_check
          %p277 = pneg %p123
        $region18: #{tpu_custom_call.1} parent=11 // pred_check_branch
          %279 = sbr.rel (%p277) target = $region20
        $region19: #{tpu_custom_call.1} parent=11 // pred_region
          _
        $region20: #{tpu_custom_call.1} parent=11 // pred_fallthru
          _
        // Predicated region
        $region21: #{tpu_custom_call.1} parent=11 // pred_check
          %p280 = pneg %p144
        $region22: #{tpu_custom_call.1} parent=11 // pred_check_branch
          %282 = sbr.rel (%p280) target = $region24
        $region23: #{tpu_custom_call.1} parent=11 // pred_region
          _
        $region24: #{tpu_custom_call.1} parent=11 // pred_fallthru
          _
        // Predicated region
        $region25: #{tpu_custom_call.1} parent=11 // pred_check
          %p283 = pneg %p165
        $region26: #{tpu_custom_call.1} parent=11 // pred_check_branch
          %285 = sbr.rel (%p283) target = $region28
        $region27: #{tpu_custom_call.1} parent=11 // pred_region
          _
        $region28: #{tpu_custom_call.1} parent=11 // pred_fallthru
          _
        // Predicated region
        $region29: #{tpu_custom_call.1} parent=11 // pred_check
          %p286 = pneg %p186
        $region30: #{tpu_custom_call.1} parent=11 // pred_check_branch
          %288 = sbr.rel (%p286) target = $region32
        $region31: #{tpu_custom_call.1} parent=11 // pred_region
          _
        $region32: #{tpu_custom_call.1} parent=11 // pred_fallthru
          _
        // Predicated region
        $region33: #{tpu_custom_call.1} parent=11 // pred_check
          %p289 = pneg %p207
        $region34: #{tpu_custom_call.1} parent=11 // pred_check_branch
          %291 = sbr.rel (%p289) target = $region36
        $region35: #{tpu_custom_call.1} parent=11 // pred_region
          %s293 = ssub.s32 16, 16
          %294 = vsyncadd [#allocation7], %s293
          %s296 = sshll.u32 %s7, 4
          %s297 = int_to_ptr.vmem [resolvable:$true] %s296
          %299 = dma.vmem_to_smem %s297, 16, [#allocation10], [#allocation7]
        $region36: #{tpu_custom_call.1} parent=11 // pred_fallthru
          _
      $region12: #{tpu_custom_call.1} parent=5 // pred_fallthru
        _
      %p300 = scmp.lt.s32.totalorder %s29, 2
      // Predicated region
      $region37: #{tpu_custom_call.1} parent=5 // pred_check
        %p301 = pneg %p300
      $region38: #{tpu_custom_call.1} parent=5 // pred_check_branch
        %303 = sbr.rel (%p301) target = $region40
      $region39: #{tpu_custom_call.1} parent=5 // pred_region
        // Predicated region
        $region41: #{tpu_custom_call.1} parent=39 // pred_check
          %p304 = pneg %p49
        $region42: #{tpu_custom_call.1} parent=39 // pred_check_branch
          %306 = sbr.rel (%p304) target = $region44
        $region43: #{tpu_custom_call.1} parent=39 // pred_region
          %s307 = sand.u32 %s39, 1
          %s308 = scalar_lea.sflag [#allocation5], %s307
          %s309 = sand.u32 %s39, 1
          %s310 = smul.addr %s309, 64
          %s311 = scalar_lea.vmem [#allocation4], %s310
          %s313 = ssub.s32 1024, 1024
          %314 = vsyncadd %s308, %s313
          %s315 = smul.addr %s29, 8
          %s316 = smul.addr %s315, 128
          %s317 = scalar_lea.hbm %s0, %s316
          %s318 = sshll.u32 %s311, 4
          %s319 = int_to_ptr.vmem [resolvable:$true] %s318
          %324 = dma.hbm_to_vmem [thread:$0]  %s317, 1024, %s319, %s308, 256, 256, 16
        $region44: #{tpu_custom_call.1} parent=39 // pred_fallthru
          _
        // Predicated region
        $region45: #{tpu_custom_call.1} parent=39 // pred_check
          %p325 = pneg %p75
        $region46: #{tpu_custom_call.1} parent=39 // pred_check_branch
          %327 = sbr.rel (%p325) target = $region48
        $region47: #{tpu_custom_call.1} parent=39 // pred_region
          %s328 = sand.u32 %s65, 1
          %s329 = scalar_lea.sflag [#allocation9], %s328
          %s330 = sand.u32 %s65, 1
          %s331 = smul.addr %s330, 64
          %s332 = scalar_lea.vmem [#allocation8], %s331
          %s334 = ssub.s32 1024, 1024
          %335 = vsyncadd %s329, %s334
          %s336 = smul.addr %s29, 8
          %s337 = smul.addr %s336, 128
          %s338 = scalar_lea.hbm %s1, %s337
          %s339 = sshll.u32 %s332, 4
          %s340 = int_to_ptr.vmem [resolvable:$true] %s339
          %345 = dma.hbm_to_vmem [thread:$0]  %s338, 1024, %s340, %s329, 256, 256, 16
        $region48: #{tpu_custom_call.1} parent=39 // pred_fallthru
          _
      $region40: #{tpu_custom_call.1} parent=5 // pred_fallthru
        _
      %p346 = scmp.le.s32.totalorder 1, %s29
      %p347 = scmp.lt.s32.totalorder %s29, 3
      %p348 = pnand %p346, %p347
      %p349 = pneg %p348
      // Predicated region
      $region49: #{tpu_custom_call.1} parent=5 // pred_check
        _
      $region50: #{tpu_custom_call.1} parent=5 // pred_check_branch
        %351 = sbr.rel (%p348) target = $region52
      $region51: #{tpu_custom_call.1} parent=5 // pred_region
        %s352 = ssub.s32 %s29, 1
        %s353 = sand.u32 %s42, 1
        %s354 = scalar_lea.sflag [#allocation5], %s353
        %s355 = sand.u32 %s42, 1
        %s356 = smul.addr %s355, 64
        %s357 = scalar_lea.vmem [#allocation4], %s356
        // Predicated region
        $region53: #{tpu_custom_call.1} parent=51 // pred_check
          %p358 = pneg %p55
        $region54: #{tpu_custom_call.1} parent=51 // pred_check_branch
          %360 = sbr.rel (%p358) target = $region56
        $region55: #{tpu_custom_call.1} parent=51 // pred_region
          %361 = dma.done %s354, 1024
        $region56: #{tpu_custom_call.1} parent=51 // pred_fallthru
          _
        %s362 = sand.u32 %s68, 1
        %s363 = scalar_lea.sflag [#allocation9], %s362
        %s364 = sand.u32 %s68, 1
        %s365 = smul.addr %s364, 64
        %s366 = scalar_lea.vmem [#allocation8], %s365
        // Predicated region
        $region57: #{tpu_custom_call.1} parent=51 // pred_check
          %p367 = pneg %p81
        $region58: #{tpu_custom_call.1} parent=51 // pred_check_branch
          %369 = sbr.rel (%p367) target = $region60
        $region59: #{tpu_custom_call.1} parent=51 // pred_region
          %370 = dma.done %s363, 1024
        $region60: #{tpu_custom_call.1} parent=51 // pred_fallthru
          _
        // Predicated region
        $region61: #{tpu_custom_call.1} parent=51 // pred_check
          %p371 = pneg %p207
        $region62: #{tpu_custom_call.1} parent=51 // pred_check_branch
          %373 = sbr.rel (%p371) target = $region64
        $region63: #{tpu_custom_call.1} parent=51 // pred_region
          %374 = dma.done [#allocation7], 16
        $region64: #{tpu_custom_call.1} parent=51 // pred_fallthru
          _
        %375 = sfence
        %s376 = sand.u32 %s42, 1
        %s377 = scalar_lea.sflag [#allocation5], %s376
        %s378 = sand.u32 %s42, 1
        %s379 = smul.addr %s378, 64
        %s380 = scalar_lea.vmem [#allocation4], %s379
        %p381 = pneg %p55
        %p382 = pneg %p52
        %s383 = sand.u32 %s68, 1
        %s384 = scalar_lea.sflag [#allocation9], %s383
        %s385 = sand.u32 %s68, 1
        %s386 = smul.addr %s385, 64
        %s387 = scalar_lea.vmem [#allocation8], %s386
        %p388 = pneg %p81
        %p389 = pneg %p78
        %p390 = pneg %p102
        %p391 = pneg %p99
        %p392 = pneg %p123
        %p393 = pneg %p120
        %p394 = pneg %p144
        %p395 = pneg %p141
        %p396 = pneg %p165
        %p397 = pneg %p162
        %p398 = pneg %p186
        %p399 = pneg %p183
        %p400 = pneg %p207
        %p401 = pneg %p204
        %p402 = pneg %p233
        %p403 = pneg %p230
        %s404 = sand.u32 %s220, 1
        %s405 = scalar_lea.sflag [#allocation6], %s404
        %s406 = sand.u32 %s220, 1
        %s407 = smul.addr %s406, 64
        %s408 = scalar_lea.vmem [#allocation11], %s407
        %p409 = pneg %p259
        %p410 = pneg %p256
        %s411 = sand.u32 %s246, 1
        %s412 = scalar_lea.sflag [#allocation13], %s411
        %s413 = sand.u32 %s246, 1
        %s414 = smul.addr %s413, 64
        %s415 = scalar_lea.vmem [#allocation12], %s414
        %416 = vst [vmem:[#allocation2] sm:$0x3] 0.0
        %vm417 = vcmask 17408
        %418 = vst.msk [vmem:[#allocation2 + $0x6] sm:$0x3] %vm417, 0.0
        %419 = vst [vmem:[#allocation3] sm:$0x3] 0.0
        %vm420 = vcmask 386048
        %421 = vst.msk [vmem:[#allocation3 + $0x6] sm:$0x3] %vm420, 0.0
        %v422 = vld [vmem:[%s357] sm:$0xff]
        %v423 = vld [vmem:[%s357 + $0x8] sm:$0xff]
        %v424 = vld [vmem:[%s357 + $0x10] sm:$0xff]
        %v425 = vld [vmem:[%s357 + $0x18] sm:$0xff]
        %v426 = vld [vmem:[%s357 + $0x20] sm:$0xff]
        %v427 = vld [vmem:[%s357 + $0x28] sm:$0xff]
        %v428 = vld [vmem:[%s357 + $0x30] sm:$0xff]
        %v429 = vld [vmem:[%s357 + $0x38] sm:$0xff]
        %v430 = vadd.f32 %v422, %v423
        %431 = vadd.xlane.f32.xlu0 %v430
        %v432 = vpop.xlane.xlu0 %431
        %v433 = vadd.f32 %v424, %v425
        %434 = vadd.xlane.f32.xlu0 %v433
        %v435 = vpop.xlane.xlu0 %434
        %v436 = vadd.f32 %v426, %v427
        %437 = vadd.xlane.f32.xlu0 %v436
        %v438 = vpop.xlane.xlu0 %437
        %v439 = vadd.f32 %v428, %v429
        %440 = vadd.xlane.f32.xlu0 %v439
        %v441 = vpop.xlane.xlu0 %440
        %v442 = vrcp.pop 256.0
        %v443 = vmul.f32 %v432, %v442
        %v444 = vmul.f32 %v435, %v442
        %v445 = vmul.f32 %v438, %v442
        %v446 = vmul.f32 %v441, %v442
        %v447 = vmax.f32 %v422, %v423
        %448 = vmax.xlane.f32.xlu0 %v447
        %v449 = vpop.xlane.xlu0 %448
        %v450 = vmax.f32 %v424, %v425
        %451 = vmax.xlane.f32.xlu0 %v450
        %v452 = vpop.xlane.xlu0 %451
        %v453 = vmax.f32 %v426, %v427
        %454 = vmax.xlane.f32.xlu0 %v453
        %v455 = vpop.xlane.xlu0 %454
        %v456 = vmax.f32 %v428, %v429
        %457 = vmax.xlane.f32.xlu0 %v456
        %v458 = vpop.xlane.xlu0 %457
        %v459 = vld [vmem:[%s366] sm:$0xff]
        %v460 = vld [vmem:[%s366 + $0x8] sm:$0xff]
        %v461 = vld [vmem:[%s366 + $0x10] sm:$0xff]
        %v462 = vld [vmem:[%s366 + $0x18] sm:$0xff]
        %v463 = vld [vmem:[%s366 + $0x20] sm:$0xff]
        %v464 = vld [vmem:[%s366 + $0x28] sm:$0xff]
        %v465 = vld [vmem:[%s366 + $0x30] sm:$0xff]
        %v466 = vld [vmem:[%s366 + $0x38] sm:$0xff]
        %v467 = vmax.f32 %v459, %v463
        %v468 = vmax.f32 %v461, %v465
        %v469 = vmax.f32 %v467, %v468
        %v470 = vrot.slane %v469, 4
        %v471 = vmax.f32 %v469, %v470
        %v472 = vrot.slane %v471, 2
        %v473 = vmax.f32 %v471, %v472
        %v474 = vrot.slane %v473, 1
        %v475 = vmax.f32 %v473, %v474
        %v476 = vmax.f32 %v460, %v464
        %v477 = vmax.f32 %v462, %v466
        %v478 = vmax.f32 %v476, %v477
        %v479 = vrot.slane %v478, 4
        %v480 = vmax.f32 %v478, %v479
        %v481 = vrot.slane %v480, 2
        %v482 = vmax.f32 %v480, %v481
        %v483 = vrot.slane %v482, 1
        %v484 = vmax.f32 %v482, %v483
        %v487 = vcombine.low %v475, %v484
        %v489 = vunpack.c.l.s4 1966171168
        %v490 = vunpack.c.0.s8 %v489
        %v491 = vlaneseq
        %v492 = vshrl.u32 %v491, 7
        %v493 = vsub.s32 %v490, %v492
        %v494 = vrot.slane %v487, %v493
        %v496 = vunpack.c.l.s4 1966171168
        %v497 = vunpack.c.0.s8 %v496
        %v498 = vlaneseq
        %v499 = vshrl.u32 %v498, 7
        %v500 = vsub.s32 %v497, %v499
        %v501 = vrot.slane %v494, %v500
        %v503 = vlaneseq
        %vm504 = vcmp.ge.s32.totalorder %v503, 0
        %vm505 = vcmp.lt.s32.totalorder %v503, 256
        %vm506 = vmand %vm504, %vm505
        %s507 = scalar_lea.vmem [#allocation2], 2
        %508 = vst.msk [vmem:[%s507] ss:$2 sm:$0x3] %vm506, %v501
        %v509 = vadd.f32 %v459, %v461
        %v510 = vadd.f32 %v509, %v463
        %v511 = vadd.f32 %v510, %v465
        %v512 = vrot.slane %v511, 4
        %v513 = vadd.f32 %v511, %v512
        %v514 = vrot.slane %v513, 2
        %v515 = vadd.f32 %v513, %v514
        %v516 = vrot.slane %v515, 1
        %v517 = vadd.f32 %v515, %v516
        %v518 = vadd.f32 %v460, %v462
        %v519 = vadd.f32 %v518, %v464
        %v520 = vadd.f32 %v519, %v466
        %v521 = vrot.slane %v520, 4
        %v522 = vadd.f32 %v520, %v521
        %v523 = vrot.slane %v522, 2
        %v524 = vadd.f32 %v522, %v523
        %v525 = vrot.slane %v524, 1
        %v526 = vadd.f32 %v524, %v525
        %v527 = vmul.f32 %v517, 0.03125
        %v528 = vmul.f32 %v526, 0.03125
        %v531 = vcombine.low %v527, %v528
        %v533 = vunpack.c.l.s4 1966171168
        %v534 = vunpack.c.0.s8 %v533
        %v535 = vlaneseq
        %v536 = vshrl.u32 %v535, 7
        %v537 = vsub.s32 %v534, %v536
        %v538 = vrot.slane %v531, %v537
        %v540 = vunpack.c.l.s4 1966171168
        %v541 = vunpack.c.0.s8 %v540
        %v542 = vlaneseq
        %v543 = vshrl.u32 %v542, 7
        %v544 = vsub.s32 %v541, %v543
        %v545 = vrot.slane %v538, %v544
        %s547 = scalar_lea.vmem [#allocation2], 3
        %548 = vst.msk [vmem:[%s547] ss:$2 sm:$0x3] %vm506, %v545
        %vm549 = vcmask 7168
        %v550 = vsel %vm549, %v443, %v449
        %v551 = vsel %vm549, %v444, %v452
        %v552 = vsel %vm549, %v445, %v455
        %v553 = vsel %vm549, %v446, %v458
        %v554 = vld [vmem:[%s2] sm:$0x3]
        %v555 = vld [vmem:[%s3] sm:$0x3]
        %557 = vset.pattern.permute.xlu0 0
        %558 = vperm.xlu0 %557, %v555
        %v559 = vpop.permute.xlu0 %558
        %vm561 = vcmask 261120
        %v563 = vsel %vm561, %v554, 0
        %565 = vmatprep.subr.mxu0 0.0
        %566 = vmatpush1.msra.mxu0 0.0
        %567 = vmatprep.subr.mxu0 0.0
        %568 = vmatpush1.msra.mxu0 0.0
        %569 = vmatprep.subr.mxu0 0.0
        %570 = vmatpush1.msra.mxu0 0.0
        %571 = vmatprep.subr.mxu0 0.0
        %572 = vmatpush1.msra.mxu0 0.0
        %573 = vmatprep.subr.mxu0 0.0
        %574 = vmatpush1.msra.mxu0 0.0
        %575 = vmatprep.subr.mxu0 0.0
        %576 = vmatpush1.msra.mxu0 0.0
        %577 = vmatprep.subr.mxu0 0.0
        %578 = vmatpush1.msra.mxu0 0.0
        %579 = vmatprep.subr.mxu0 0.0
        %580 = vmatpush1.msra.mxu0 0.0
        %581 = vmatprep.subr.mxu0 0.0
        %582 = vmatpush1.msra.mxu0 0.0
        %583 = vmatprep.subr.mxu0 0.0
        %584 = vmatpush1.msra.mxu0 0.0
        %585 = vmatprep.subr.mxu0 0.0
        %586 = vmatpush1.msra.mxu0 0.0
        %587 = vmatprep.subr.mxu0 0.0
        %588 = vmatpush1.msra.mxu0 0.0
        %589 = vmatprep.subr.mxu0 0.0
        %590 = vmatpush1.msra.mxu0 %v553
        %591 = vmatprep.subr.mxu0 0.0
        %592 = vmatpush1.msra.mxu0 %v552
        %593 = vmatprep.subr.mxu0 0.0
        %594 = vmatpush1.msra.mxu0 %v551
        %595 = vmatprep.subr.mxu0 0.0
        %596 = vmatpush1.msra.mxu0 %v550
        %597 = vmatprep.subr.mxu0 0.0
        %598 = vmatpush2.msra.mxu0 0.0
        %599 = vmatprep.subr.mxu0 0.0
        %600 = vmatpush2.msra.mxu0 0.0
        %601 = vmatprep.subr.mxu0 0.0
        %602 = vmatpush2.msra.mxu0 0.0
        %603 = vmatprep.subr.mxu0 0.0
        %604 = vmatpush2.msra.mxu0 0.0
        %605 = vmatprep.subr.mxu0 0.0
        %606 = vmatpush2.msra.mxu0 0.0
        %607 = vmatprep.subr.mxu0 0.0
        %608 = vmatpush2.msra.mxu0 0.0
        %609 = vmatprep.subr.mxu0 0.0
        %610 = vmatpush2.msra.mxu0 0.0
        %611 = vmatprep.subr.mxu0 0.0
        %612 = vmatpush2.msra.mxu0 0.0
        %613 = vmatprep.subr.mxu0 0.0
        %614 = vmatpush2.msra.mxu0 0.0
        %615 = vmatprep.subr.mxu0 0.0
        %616 = vmatpush2.msra.mxu0 0.0
        %617 = vmatprep.subr.mxu0 0.0
        %618 = vmatpush2.msra.mxu0 0.0
        %619 = vmatprep.subr.mxu0 0.0
        %620 = vmatpush2.msra.mxu0 0.0
        %621 = vmatprep.subr.mxu0 0.0
        %622 = vmatpush2.msra.mxu0 0.0
        %623 = vmatprep.subr.mxu0 0.0
        %624 = vmatpush2.msra.mxu0 0.0
        %625 = vmatprep.subr.mxu0 0.0
        %626 = vmatpush2.msra.mxu0 0.0
        %627 = vmatprep.subr.mxu0 0.0
        %628 = vmatpush2.msra.mxu0 0.0
        %629 = vmatprep.mubr.f32.mxu0 0.0
        %630 = vmatmul.mubr.f32.gmra.mxu0 %v563
        %v631 = vpop.f32.mrf.mxu0
        %v632 = vadd.f32 %v559, %v631
        %v633 = vpop.f32.mrf.mxu0
        %634 = vdwg.mxu0
        %v635 = vmax.f32 %v632, 0.0
        %v636 = vld [vmem:[%s4] sm:$0xff]
        %v637 = vld [vmem:[%s4 + $0x8] sm:$0xff]
        %v638 = vld [vmem:[%s4 + $0x10] sm:$0xff]
        %v639 = vld [vmem:[%s4 + $0x18] sm:$0xff]
        %v640 = vld [vmem:[%s5] sm:$0xff]
        %v641 = vld [vmem:[%s5 + $0x8] sm:$0xff]
        %v642 = vld [vmem:[%s5 + $0x10] sm:$0xff]
        %v643 = vld [vmem:[%s5 + $0x18] sm:$0xff]
        %645 = vset.pattern.permute.xlu0 0
        %646 = vperm.xlu0 %645, %v640
        %v647 = vpop.permute.xlu0 %646
        %650 = vset.pattern.permute.xlu0 0
        %651 = vperm.xlu0 %650, %v641
        %v652 = vpop.permute.xlu0 %651
        %655 = vset.pattern.permute.xlu0 0
        %656 = vperm.xlu0 %655, %v642
        %v657 = vpop.permute.xlu0 %656
        %660 = vset.pattern.permute.xlu0 0
        %661 = vperm.xlu0 %660, %v643
        %v662 = vpop.permute.xlu0 %661
        %vm664 = vcmask 15360
        %v666 = vsel %vm664, %v636, 0
        %v669 = vsel %vm664, %v637, 0
        %v672 = vsel %vm664, %v638, 0
        %v675 = vsel %vm664, %v639, 0
        %vm677 = vcmask 1041408
        %v679 = vsel %vm677, %v635, 0
        %681 = vmatprep.subr.mxu0 0.0
        %682 = vmatpush1.msra.mxu0 0.0
        %683 = vmatprep.subr.mxu0 0.0
        %684 = vmatpush1.msra.mxu0 0.0
        %685 = vmatprep.subr.mxu0 0.0
        %686 = vmatpush1.msra.mxu0 0.0
        %687 = vmatprep.subr.mxu0 0.0
        %688 = vmatpush1.msra.mxu0 0.0
        %689 = vmatprep.subr.mxu0 0.0
        %690 = vmatpush1.msra.mxu0 0.0
        %691 = vmatprep.subr.mxu0 0.0
        %692 = vmatpush1.msra.mxu0 0.0
        %693 = vmatprep.subr.mxu0 0.0
        %694 = vmatpush1.msra.mxu0 0.0
        %695 = vmatprep.subr.mxu0 0.0
        %696 = vmatpush1.msra.mxu0 0.0
        %697 = vmatprep.subr.mxu0 0.0
        %698 = vmatpush1.msra.mxu0 0.0
        %699 = vmatprep.subr.mxu0 0.0
        %700 = vmatpush1.msra.mxu0 0.0
        %701 = vmatprep.subr.mxu0 0.0
        %702 = vmatpush1.msra.mxu0 0.0
        %703 = vmatprep.subr.mxu0 0.0
        %704 = vmatpush1.msra.mxu0 0.0
        %705 = vmatprep.subr.mxu0 0.0
        %706 = vmatpush1.msra.mxu0 0.0
        %707 = vmatprep.subr.mxu0 0.0
        %708 = vmatpush1.msra.mxu0 0.0
        %709 = vmatprep.subr.mxu0 0.0
        %710 = vmatpush1.msra.mxu0 0.0
        %711 = vmatprep.subr.mxu0 0.0
        %712 = vmatpush1.msra.mxu0 %v679
        %713 = vmatprep.subr.mxu0 0.0
        %714 = vmatpush2.msra.mxu0 0.0
        %715 = vmatprep.subr.mxu0 0.0
        %716 = vmatpush2.msra.mxu0 0.0
        %717 = vmatprep.subr.mxu0 0.0
        %718 = vmatpush2.msra.mxu0 0.0
        %719 = vmatprep.subr.mxu0 0.0
        %720 = vmatpush2.msra.mxu0 0.0
        %721 = vmatprep.subr.mxu0 0.0
        %722 = vmatpush2.msra.mxu0 0.0
        %723 = vmatprep.subr.mxu0 0.0
        %724 = vmatpush2.msra.mxu0 0.0
        %725 = vmatprep.subr.mxu0 0.0
        %726 = vmatpush2.msra.mxu0 0.0
        %727 = vmatprep.subr.mxu0 0.0
        %728 = vmatpush2.msra.mxu0 0.0
        %729 = vmatprep.subr.mxu0 0.0
        %730 = vmatpush2.msra.mxu0 0.0
        %731 = vmatprep.subr.mxu0 0.0
        %732 = vmatpush2.msra.mxu0 0.0
        %733 = vmatprep.subr.mxu0 0.0
        %734 = vmatpush2.msra.mxu0 0.0
        %735 = vmatprep.subr.mxu0 0.0
        %736 = vmatpush2.msra.mxu0 0.0
        %737 = vmatprep.subr.mxu0 0.0
        %738 = vmatpush2.msra.mxu0 0.0
        %739 = vmatprep.subr.mxu0 0.0
        %740 = vmatpush2.msra.mxu0 0.0
        %741 = vmatprep.subr.mxu0 0.0
        %742 = vmatpush2.msra.mxu0 0.0
        %743 = vmatprep.subr.mxu0 0.0
        %744 = vmatpush2.msra.mxu0 0.0
        %745 = vmatprep.mubr.f32.mxu0 0.0
        %746 = vmatmul.mubr.f32.gmra.mxu0 %v666
        %v747 = vpop.f32.mrf.mxu0
        %v748 = vadd.f32 %v647, %v747
        %v749 = vpop.f32.mrf.mxu0
        %750 = vmatprep.mubr.f32.mxu0 0.0
        %751 = vmatmul.mubr.f32.gmra.mxu0 %v669
        %v752 = vpop.f32.mrf.mxu0
        %v753 = vadd.f32 %v652, %v752
        %v754 = vpop.f32.mrf.mxu0
        %755 = vmatprep.mubr.f32.mxu0 0.0
        %756 = vmatmul.mubr.f32.gmra.mxu0 %v672
        %v757 = vpop.f32.mrf.mxu0
        %v758 = vadd.f32 %v657, %v757
        %v759 = vpop.f32.mrf.mxu0
        %760 = vmatprep.mubr.f32.mxu0 0.0
        %761 = vmatmul.mubr.f32.gmra.mxu0 %v675
        %v762 = vpop.f32.mrf.mxu0
        %v763 = vadd.f32 %v662, %v762
        %v764 = vpop.f32.mrf.mxu0
        %765 = vdwg.mxu0
        %770 = vrot.lane.b32.xlu0 %v748, 127
        %v771 = vpop.permute.xlu0 %770
        %772 = vrot.lane.b32.xlu0 %v753, 127
        %v773 = vpop.permute.xlu0 %772
        %774 = vrot.lane.b32.xlu0 %v758, 127
        %v775 = vpop.permute.xlu0 %774
        %776 = vrot.lane.b32.xlu0 %v763, 127
        %v777 = vpop.permute.xlu0 %776
        %v782 = vadd.f32 %v748, %v771
        %v783 = vadd.f32 %v753, %v773
        %v784 = vadd.f32 %v758, %v775
        %v785 = vadd.f32 %v763, %v777
        %v786 = vxor.u32 %v782, 2147483648
        %v787 = vxor.u32 %v783, 2147483648
        %v788 = vxor.u32 %v784, 2147483648
        %v789 = vxor.u32 %v785, 2147483648
        %v790 = vmul.f32 %v786, 1.442695
        %v791 = vpow.pop %v790
        %v792 = vmul.f32 %v787, 1.442695
        %v793 = vpow.pop %v792
        %v794 = vmul.f32 %v788, 1.442695
        %v795 = vpow.pop %v794
        %v796 = vmul.f32 %v789, 1.442695
        %v797 = vpow.pop %v796
        %v798 = vadd.f32 %v791, 1.0
        %v799 = vadd.f32 %v793, 1.0
        %v800 = vadd.f32 %v795, 1.0
        %v801 = vadd.f32 %v797, 1.0
        %v802 = vrcp.pop %v798
        %v803 = vmul.f32 1.0, %v802
        %v804 = vrcp.pop %v799
        %v805 = vmul.f32 1.0, %v804
        %v806 = vrcp.pop %v800
        %v807 = vmul.f32 1.0, %v806
        %v808 = vrcp.pop %v801
        %v809 = vmul.f32 1.0, %v808
        %v810 = vlaneseq
        %v811 = vand.u32 %v810, 127
        %v812 = vadd.s32 %v811, 128
        %v813 = vcvt.s32.f32 %v811
        %v814 = vcvt.s32.f32 %v812
        %v815 = vadd.f32 %v813, 0.5
        %v816 = vadd.f32 %v814, 0.5
        %v817 = vmul.f32 %v815, 0.0625
        %v818 = vmul.f32 %v816, 0.0625
        %v819 = vfloor.f32 %v817
        %v820 = vfloor.f32 %v818
        %v821 = vmul.f32 %v819, 16.0
        %v822 = vmul.f32 %v820, 16.0
        %v823 = vsub.f32 %v813, %v821
        %v824 = vsub.f32 %v814, %v822
        %v825 = vld [vmem:[#allocation2] sm:$0x3f]
        %vm826 = vcmp.ge.f32.partialorder %v823, 3.0
        %vm827 = vcmp.ge.f32.partialorder %v824, 3.0
        %vm828 = vcmp.le.f32.partialorder %v823, 18.0
        %vm829 = vcmp.le.f32.partialorder %v824, 18.0
        %vm830 = vmand %vm826, %vm828
        %vm831 = vmand %vm827, %vm829
        %v832 = vsel %vm830, 1, 0
        %v833 = vsel %vm831, 1, 0
        %v834 = vcvt.s32.f32 %v832
        %v835 = vcvt.s32.f32 %v833
        %v837 = vcombine.high %v825, %v825
        %v839 = vunpack.c.l.s4 1983009808
        %v840 = vunpack.c.0.s8 %v839
        %v841 = vlaneseq
        %v842 = vshrl.u32 %v841, 7
        %v843 = vsub.s32 %v840, %v842
        %v844 = vrot.slane %v825, %v843
        %v846 = vunpack.c.l.s4 1983009808
        %v847 = vunpack.c.0.s8 %v846
        %v848 = vlaneseq
        %v849 = vshrl.u32 %v848, 7
        %v850 = vsub.s32 %v847, %v849
        %v851 = vrot.slane %v837, %v850
        %v852 = vcombine.high %v844, %v844
        %853 = vrot.lane.b32.xlu0 %v844, 3
        %v854 = vpop.permute.xlu0 %853
        %855 = vrot.lane.b32.xlu0 %v852, 3
        %v856 = vpop.permute.xlu0 %855
        %857 = vrot.lane.b32.xlu0 %v851, 3
        %v858 = vpop.permute.xlu0 %857
        %vm859 = vcmask 23552
        %v860 = vsel %vm859, %v854, %v856
        %v861 = vsel %vm859, %v856, %v858
        %v864 = vmul.f32 %v834, %v860
        %v865 = vmul.f32 %v835, %v861
        %vm866 = vcmp.ge.f32.partialorder %v823, 2.0
        %vm867 = vcmp.ge.f32.partialorder %v824, 2.0
        %vm868 = vcmp.le.f32.partialorder %v823, 17.0
        %vm869 = vcmp.le.f32.partialorder %v824, 17.0
        %vm870 = vmand %vm866, %vm868
        %vm871 = vmand %vm867, %vm869
        %v872 = vsel %vm870, 1, 0
        %v873 = vsel %vm871, 1, 0
        %v874 = vcvt.s32.f32 %v872
        %v875 = vcvt.s32.f32 %v873
        %876 = vrot.lane.b32.xlu0 %v844, 2
        %v877 = vpop.permute.xlu0 %876
        %878 = vrot.lane.b32.xlu0 %v852, 2
        %v879 = vpop.permute.xlu0 %878
        %880 = vrot.lane.b32.xlu0 %v851, 2
        %v881 = vpop.permute.xlu0 %880
        %v882 = vsel %vm664, %v877, %v879
        %v883 = vsel %vm664, %v879, %v881
        %v886 = vmul.f32 %v874, %v882
        %v887 = vmul.f32 %v875, %v883
        %vm888 = vcmp.ge.f32.partialorder %v823, 1.0
        %vm889 = vcmp.ge.f32.partialorder %v824, 1.0
        %vm890 = vcmp.le.f32.partialorder %v823, 16.0
        %vm891 = vcmp.le.f32.partialorder %v824, 16.0
        %vm892 = vmand %vm888, %vm890
        %vm893 = vmand %vm889, %vm891
        %v894 = vsel %vm892, 1, 0
        %v895 = vsel %vm893, 1, 0
        %v896 = vcvt.s32.f32 %v894
        %v897 = vcvt.s32.f32 %v895
        %898 = vrot.lane.b32.xlu0 %v844, 1
        %v899 = vpop.permute.xlu0 %898
        %900 = vrot.lane.b32.xlu0 %v852, 1
        %v901 = vpop.permute.xlu0 %900
        %902 = vrot.lane.b32.xlu0 %v851, 1
        %v903 = vpop.permute.xlu0 %902
        %v904 = vsel %vm549, %v899, %v901
        %v905 = vsel %vm549, %v901, %v903
        %v908 = vmul.f32 %v896, %v904
        %v909 = vmul.f32 %v897, %v905
        %v910 = vld [vmem:[#allocation2 + $0x2] sm:$0xf]
        %v911 = vld [vmem:[#allocation2 + $0x2] sm:$0x3f]
        %vm912 = vcmp.ge.f32.partialorder %v823, -1.0
        %vm913 = vcmp.ge.f32.partialorder %v824, -1.0
        %vm914 = vcmp.le.f32.partialorder %v823, 14.0
        %vm915 = vcmp.le.f32.partialorder %v824, 14.0
        %vm916 = vmand %vm912, %vm914
        %vm917 = vmand %vm913, %vm915
        %v918 = vsel %vm916, 1, 0
        %v919 = vsel %vm917, 1, 0
        %v920 = vcvt.s32.f32 %v918
        %v921 = vcvt.s32.f32 %v919
        %v923 = vcombine.high %v911, %v911
        %v925 = vunpack.c.l.s4 1983009808
        %v926 = vunpack.c.0.s8 %v925
        %v927 = vlaneseq
        %v928 = vshrl.u32 %v927, 7
        %v929 = vsub.s32 %v926, %v928
        %v930 = vrot.slane %v911, %v929
        %v932 = vunpack.c.l.s4 1983009808
        %v933 = vunpack.c.0.s8 %v932
        %v934 = vlaneseq
        %v935 = vshrl.u32 %v934, 7
        %v936 = vsub.s32 %v933, %v935
        %v937 = vrot.slane %v923, %v936
        %v938 = vcombine.high %v930, %v930
        %939 = vrot.lane.b32.xlu0 %v930, 127
        %v940 = vpop.permute.xlu0 %939
        %941 = vrot.lane.b32.xlu0 %v938, 127
        %v942 = vpop.permute.xlu0 %941
        %943 = vrot.lane.b32.xlu0 %v937, 127
        %v944 = vpop.permute.xlu0 %943
        %vm945 = vcmask 1039360
        %v946 = vsel %vm945, %v940, %v942
        %v947 = vsel %vm945, %v942, %v944
        %v950 = vmul.f32 %v920, %v946
        %v951 = vmul.f32 %v921, %v947
        %vm952 = vcmp.ge.f32.partialorder %v823, -2.0
        %vm953 = vcmp.ge.f32.partialorder %v824, -2.0
        %vm954 = vcmp.le.f32.partialorder %v823, 13.0
        %vm955 = vcmp.le.f32.partialorder %v824, 13.0
        %vm956 = vmand %vm952, %vm954
        %vm957 = vmand %vm953, %vm955
        %v958 = vsel %vm956, 1, 0
        %v959 = vsel %vm957, 1, 0
        %v960 = vcvt.s32.f32 %v958
        %v961 = vcvt.s32.f32 %v959
        %962 = vrot.lane.b32.xlu0 %v930, 126
        %v963 = vpop.permute.xlu0 %962
        %964 = vrot.lane.b32.xlu0 %v938, 126
        %v965 = vpop.permute.xlu0 %964
        %966 = vrot.lane.b32.xlu0 %v937, 126
        %v967 = vpop.permute.xlu0 %966
        %vm968 = vcmask 1031168
        %v969 = vsel %vm968, %v963, %v965
        %v970 = vsel %vm968, %v965, %v967
        %v973 = vmul.f32 %v960, %v969
        %v974 = vmul.f32 %v961, %v970
        %vm975 = vcmp.ge.f32.partialorder %v823, -3.0
        %vm976 = vcmp.ge.f32.partialorder %v824, -3.0
        %vm977 = vcmp.le.f32.partialorder %v823, 12.0
        %vm978 = vcmp.le.f32.partialorder %v824, 12.0
        %vm979 = vmand %vm975, %vm977
        %vm980 = vmand %vm976, %vm978
        %v981 = vsel %vm979, 1, 0
        %v982 = vsel %vm980, 1, 0
        %v983 = vcvt.s32.f32 %v981
        %v984 = vcvt.s32.f32 %v982
        %985 = vrot.lane.b32.xlu0 %v930, 125
        %v986 = vpop.permute.xlu0 %985
        %987 = vrot.lane.b32.xlu0 %v938, 125
        %v988 = vpop.permute.xlu0 %987
        %989 = vrot.lane.b32.xlu0 %v937, 125
        %v990 = vpop.permute.xlu0 %989
        %vm991 = vcmask 1022976
        %v992 = vsel %vm991, %v986, %v988
        %v993 = vsel %vm991, %v988, %v990
        %v996 = vmul.f32 %v983, %v992
        %v997 = vmul.f32 %v984, %v993
        %v998 = vld [vmem:[%s6] sm:$0x3]
        %1000 = vset.pattern.permute.xlu0 0
        %1001 = vperm.xlu0 %1000, %v998
        %v1002 = vpop.permute.xlu0 %1001
        %v1004 = vmul.f32 %v1002, %v864
        %v1005 = vmul.f32 %v1002, %v865
        %v1006 = vadd.f32 %v1004, 0.0
        %v1007 = vadd.f32 %v1005, 0.0
        %1008 = vset.pattern.permute.xlu0 1
        %1009 = vperm.xlu0 %1008, %v998
        %v1010 = vpop.permute.xlu0 %1009
        %v1012 = vmul.f32 %v1010, %v886
        %v1013 = vmul.f32 %v1010, %v887
        %v1014 = vadd.f32 %v1006, %v1012
        %v1015 = vadd.f32 %v1007, %v1013
        %1016 = vset.pattern.permute.xlu0 2
        %1017 = vperm.xlu0 %1016, %v998
        %v1018 = vpop.permute.xlu0 %1017
        %v1020 = vmul.f32 %v1018, %v908
        %v1021 = vmul.f32 %v1018, %v909
        %v1022 = vadd.f32 %v1014, %v1020
        %v1023 = vadd.f32 %v1015, %v1021
        %1024 = vset.pattern.permute.xlu0 3
        %1025 = vperm.xlu0 %1024, %v998
        %v1026 = vpop.permute.xlu0 %1025
        %v1030 = vunpack.c.l.s4 1983009808
        %v1031 = vunpack.c.0.s8 %v1030
        %v1032 = vlaneseq
        %v1033 = vshrl.u32 %v1032, 7
        %v1034 = vsub.s32 %v1031, %v1033
        %v1035 = vrot.slane %v910, %v1034
        %v1036 = vcombine.high %v1035, %v1035
        %v1039 = vmul.f32 %v1026, %v1035
        %v1040 = vmul.f32 %v1026, %v1036
        %v1041 = vadd.f32 %v1022, %v1039
        %v1042 = vadd.f32 %v1023, %v1040
        %1043 = vset.pattern.permute.xlu0 4
        %1044 = vperm.xlu0 %1043, %v998
        %v1045 = vpop.permute.xlu0 %1044
        %v1047 = vmul.f32 %v1045, %v950
        %v1048 = vmul.f32 %v1045, %v951
        %v1049 = vadd.f32 %v1041, %v1047
        %v1050 = vadd.f32 %v1042, %v1048
        %1051 = vset.pattern.permute.xlu0 5
        %1052 = vperm.xlu0 %1051, %v998
        %v1053 = vpop.permute.xlu0 %1052
        %v1055 = vmul.f32 %v1053, %v973
        %v1056 = vmul.f32 %v1053, %v974
        %v1057 = vadd.f32 %v1049, %v1055
        %v1058 = vadd.f32 %v1050, %v1056
        %1059 = vset.pattern.permute.xlu0 6
        %1060 = vperm.xlu0 %1059, %v998
        %v1061 = vpop.permute.xlu0 %1060
        %v1063 = vmul.f32 %v1061, %v996
        %v1064 = vmul.f32 %v1061, %v997
        %v1065 = vadd.f32 %v1057, %v1063
        %v1066 = vadd.f32 %v1058, %v1064
        %v1069 = vcombine.low %v1065, %v1066
        %v1071 = vunpack.c.l.s4 1983009808
        %v1072 = vunpack.c.0.s8 %v1071
        %v1073 = vlaneseq
        %v1074 = vshrl.u32 %v1073, 7
        %v1075 = vsub.s32 %v1072, %v1074
        %v1076 = vrot.slane %v1069, %v1075
        %1078 = vst [vmem:[#allocation3 + $0x2] sm:$0xf] %v1076
        %v1079 = vld [vmem:[#allocation3] sm:$0x3f]
        %v1080 = vadd.f32 %v1079, 0.0
        %1081 = vset.pattern.permute.xlu0 7
        %1082 = vperm.xlu0 %1081, %v998
        %v1083 = vpop.permute.xlu0 %1082
        %v1085 = vmul.f32 %v1083, %v864
        %v1086 = vmul.f32 %v1083, %v865
        %v1087 = vadd.f32 %v1085, 0.0
        %v1088 = vadd.f32 %v1086, 0.0
        %1089 = vset.pattern.permute.xlu0 8
        %1090 = vperm.xlu0 %1089, %v998
        %v1091 = vpop.permute.xlu0 %1090
        %v1093 = vmul.f32 %v1091, %v886
        %v1094 = vmul.f32 %v1091, %v887
        %v1095 = vadd.f32 %v1087, %v1093
        %v1096 = vadd.f32 %v1088, %v1094
        %1097 = vset.pattern.permute.xlu0 9
        %1098 = vperm.xlu0 %1097, %v998
        %v1099 = vpop.permute.xlu0 %1098
        %v1101 = vmul.f32 %v1099, %v908
        %v1102 = vmul.f32 %v1099, %v909
        %v1103 = vadd.f32 %v1095, %v1101
        %v1104 = vadd.f32 %v1096, %v1102
        %1105 = vset.pattern.permute.xlu0 10
        %1106 = vperm.xlu0 %1105, %v998
        %v1107 = vpop.permute.xlu0 %1106
        %v1109 = vmul.f32 %v1107, %v1035
        %v1110 = vmul.f32 %v1107, %v1036
        %v1111 = vadd.f32 %v1103, %v1109
        %v1112 = vadd.f32 %v1104, %v1110
        %1113 = vset.pattern.permute.xlu0 11
        %1114 = vperm.xlu0 %1113, %v998
        %v1115 = vpop.permute.xlu0 %1114
        %v1117 = vmul.f32 %v1115, %v950
        %v1118 = vmul.f32 %v1115, %v951
        %v1119 = vadd.f32 %v1111, %v1117
        %v1120 = vadd.f32 %v1112, %v1118
        %1121 = vset.pattern.permute.xlu0 12
        %1122 = vperm.xlu0 %1121, %v998
        %v1123 = vpop.permute.xlu0 %1122
        %v1125 = vmul.f32 %v1123, %v973
        %v1126 = vmul.f32 %v1123, %v974
        %v1127 = vadd.f32 %v1119, %v1125
        %v1128 = vadd.f32 %v1120, %v1126
        %1129 = vset.pattern.permute.xlu0 13
        %1130 = vperm.xlu0 %1129, %v998
        %v1131 = vpop.permute.xlu0 %1130
        %v1133 = vmul.f32 %v1131, %v996
        %v1134 = vmul.f32 %v1131, %v997
        %v1135 = vadd.f32 %v1127, %v1133
        %v1136 = vadd.f32 %v1128, %v1134
        %v1139 = vcombine.low %v1135, %v1136
        %v1141 = vunpack.c.l.s4 1983009808
        %v1142 = vunpack.c.0.s8 %v1141
        %v1143 = vlaneseq
        %v1144 = vshrl.u32 %v1143, 7
        %v1145 = vsub.s32 %v1142, %v1144
        %v1146 = vrot.slane %v1139, %v1145
        %1148 = vst [vmem:[#allocation3 + $0x2] sm:$0xf] %v1146
        %v1149 = vld [vmem:[#allocation3] sm:$0x3f]
        %1151 = vrot.lane.b32.xlu0 %v1149, 112
        %v1152 = vpop.permute.xlu0 %1151
        %v1153 = vrot.slane %v1152, 2
        %vm1154 = vcmask 916480
        %v1155 = vsel %vm1154, %v1152, %v1153
        %v1157 = vadd.f32 %v1080, %v1155
        %1158 = vset.pattern.permute.xlu0 14
        %1159 = vperm.xlu0 %1158, %v998
        %v1160 = vpop.permute.xlu0 %1159
        %v1162 = vmul.f32 %v1160, %v864
        %v1163 = vmul.f32 %v1160, %v865
        %v1164 = vadd.f32 %v1162, 0.0
        %v1165 = vadd.f32 %v1163, 0.0
        %1166 = vset.pattern.permute.xlu0 15
        %1167 = vperm.xlu0 %1166, %v998
        %v1168 = vpop.permute.xlu0 %1167
        %v1170 = vmul.f32 %v1168, %v886
        %v1171 = vmul.f32 %v1168, %v887
        %v1172 = vadd.f32 %v1164, %v1170
        %v1173 = vadd.f32 %v1165, %v1171
        %1174 = vset.pattern.permute.xlu0 16
        %1175 = vperm.xlu0 %1174, %v998
        %v1176 = vpop.permute.xlu0 %1175
        %v1178 = vmul.f32 %v1176, %v908
        %v1179 = vmul.f32 %v1176, %v909
        %v1180 = vadd.f32 %v1172, %v1178
        %v1181 = vadd.f32 %v1173, %v1179
        %1182 = vset.pattern.permute.xlu0 17
        %1183 = vperm.xlu0 %1182, %v998
        %v1184 = vpop.permute.xlu0 %1183
        %v1186 = vmul.f32 %v1184, %v1035
        %v1187 = vmul.f32 %v1184, %v1036
        %v1188 = vadd.f32 %v1180, %v1186
        %v1189 = vadd.f32 %v1181, %v1187
        %1190 = vset.pattern.permute.xlu0 18
        %1191 = vperm.xlu0 %1190, %v998
        %v1192 = vpop.permute.xlu0 %1191
        %v1194 = vmul.f32 %v1192, %v950
        %v1195 = vmul.f32 %v1192, %v951
        %v1196 = vadd.f32 %v1188, %v1194
        %v1197 = vadd.f32 %v1189, %v1195
        %1198 = vset.pattern.permute.xlu0 19
        %1199 = vperm.xlu0 %1198, %v998
        %v1200 = vpop.permute.xlu0 %1199
        %v1202 = vmul.f32 %v1200, %v973
        %v1203 = vmul.f32 %v1200, %v974
        %v1204 = vadd.f32 %v1196, %v1202
        %v1205 = vadd.f32 %v1197, %v1203
        %1206 = vset.pattern.permute.xlu0 20
        %1207 = vperm.xlu0 %1206, %v998
        %v1208 = vpop.permute.xlu0 %1207
        %v1210 = vmul.f32 %v1208, %v996
        %v1211 = vmul.f32 %v1208, %v997
        %v1212 = vadd.f32 %v1204, %v1210
        %v1213 = vadd.f32 %v1205, %v1211
        %v1216 = vcombine.low %v1212, %v1213
        %v1218 = vunpack.c.l.s4 1983009808
        %v1219 = vunpack.c.0.s8 %v1218
        %v1220 = vlaneseq
        %v1221 = vshrl.u32 %v1220, 7
        %v1222 = vsub.s32 %v1219, %v1221
        %v1223 = vrot.slane %v1216, %v1222
        %1225 = vst [vmem:[#allocation3 + $0x2] sm:$0xf] %v1223
        %v1226 = vld [vmem:[#allocation3] sm:$0x3f]
        %1228 = vrot.lane.b32.xlu0 %v1226, 96
        %v1229 = vpop.permute.xlu0 %1228
        %v1230 = vrot.slane %v1229, 2
        %vm1231 = vcmask 785408
        %v1232 = vsel %vm1231, %v1229, %v1230
        %v1234 = vadd.f32 %v1157, %v1232
        %1235 = vset.pattern.permute.xlu0 21
        %1236 = vperm.xlu0 %1235, %v998
        %v1237 = vpop.permute.xlu0 %1236
        %v1239 = vmul.f32 %v1237, %v864
        %v1240 = vmul.f32 %v1237, %v865
        %v1241 = vadd.f32 %v1239, 0.0
        %v1242 = vadd.f32 %v1240, 0.0
        %1243 = vset.pattern.permute.xlu0 22
        %1244 = vperm.xlu0 %1243, %v998
        %v1245 = vpop.permute.xlu0 %1244
        %v1247 = vmul.f32 %v1245, %v886
        %v1248 = vmul.f32 %v1245, %v887
        %v1249 = vadd.f32 %v1241, %v1247
        %v1250 = vadd.f32 %v1242, %v1248
        %1251 = vset.pattern.permute.xlu0 23
        %1252 = vperm.xlu0 %1251, %v998
        %v1253 = vpop.permute.xlu0 %1252
        %v1255 = vmul.f32 %v1253, %v908
        %v1256 = vmul.f32 %v1253, %v909
        %v1257 = vadd.f32 %v1249, %v1255
        %v1258 = vadd.f32 %v1250, %v1256
        %1259 = vset.pattern.permute.xlu0 24
        %1260 = vperm.xlu0 %1259, %v998
        %v1261 = vpop.permute.xlu0 %1260
        %v1263 = vmul.f32 %v1261, %v1035
        %v1264 = vmul.f32 %v1261, %v1036
        %v1265 = vadd.f32 %v1257, %v1263
        %v1266 = vadd.f32 %v1258, %v1264
        %1267 = vset.pattern.permute.xlu0 25
        %1268 = vperm.xlu0 %1267, %v998
        %v1269 = vpop.permute.xlu0 %1268
        %v1271 = vmul.f32 %v1269, %v950
        %v1272 = vmul.f32 %v1269, %v951
        %v1273 = vadd.f32 %v1265, %v1271
        %v1274 = vadd.f32 %v1266, %v1272
        %1275 = vset.pattern.permute.xlu0 26
        %1276 = vperm.xlu0 %1275, %v998
        %v1277 = vpop.permute.xlu0 %1276
        %v1279 = vmul.f32 %v1277, %v973
        %v1280 = vmul.f32 %v1277, %v974
        %v1281 = vadd.f32 %v1273, %v1279
        %v1282 = vadd.f32 %v1274, %v1280
        %1283 = vset.pattern.permute.xlu0 27
        %1284 = vperm.xlu0 %1283, %v998
        %v1285 = vpop.permute.xlu0 %1284
        %v1287 = vmul.f32 %v1285, %v996
        %v1288 = vmul.f32 %v1285, %v997
        %v1289 = vadd.f32 %v1281, %v1287
        %v1290 = vadd.f32 %v1282, %v1288
        %v1293 = vcombine.low %v1289, %v1290
        %v1295 = vunpack.c.l.s4 1983009808
        %v1296 = vunpack.c.0.s8 %v1295
        %v1297 = vlaneseq
        %v1298 = vshrl.u32 %v1297, 7
        %v1299 = vsub.s32 %v1296, %v1298
        %v1300 = vrot.slane %v1293, %v1299
        %1301 = vrot.lane.b32.xlu0 %v1300, 80
        %v1302 = vpop.permute.xlu0 %1301
        %v1303 = vrot.slane %v1302, 6
        %vm1304 = vcmask 654336
        %v1305 = vsel %vm1304, %v1303, %v1302
        %v1307 = vadd.f32 %v1234, %v1305
        %1308 = vset.pattern.permute.xlu0 28
        %1309 = vperm.xlu0 %1308, %v998
        %v1310 = vpop.permute.xlu0 %1309
        %v1312 = vmul.f32 %v1310, %v864
        %v1313 = vmul.f32 %v1310, %v865
        %v1314 = vadd.f32 %v1312, 0.0
        %v1315 = vadd.f32 %v1313, 0.0
        %1316 = vset.pattern.permute.xlu0 29
        %1317 = vperm.xlu0 %1316, %v998
        %v1318 = vpop.permute.xlu0 %1317
        %v1320 = vmul.f32 %v1318, %v886
        %v1321 = vmul.f32 %v1318, %v887
        %v1322 = vadd.f32 %v1314, %v1320
        %v1323 = vadd.f32 %v1315, %v1321
        %1324 = vset.pattern.permute.xlu0 30
        %1325 = vperm.xlu0 %1324, %v998
        %v1326 = vpop.permute.xlu0 %1325
        %v1328 = vmul.f32 %v1326, %v908
        %v1329 = vmul.f32 %v1326, %v909
        %v1330 = vadd.f32 %v1322, %v1328
        %v1331 = vadd.f32 %v1323, %v1329
        %1332 = vset.pattern.permute.xlu0 31
        %1333 = vperm.xlu0 %1332, %v998
        %v1334 = vpop.permute.xlu0 %1333
        %v1336 = vmul.f32 %v1334, %v1035
        %v1337 = vmul.f32 %v1334, %v1036
        %v1338 = vadd.f32 %v1330, %v1336
        %v1339 = vadd.f32 %v1331, %v1337
        %1340 = vset.pattern.permute.xlu0 32
        %1341 = vperm.xlu0 %1340, %v998
        %v1342 = vpop.permute.xlu0 %1341
        %v1344 = vmul.f32 %v1342, %v950
        %v1345 = vmul.f32 %v1342, %v951
        %v1346 = vadd.f32 %v1338, %v1344
        %v1347 = vadd.f32 %v1339, %v1345
        %1348 = vset.pattern.permute.xlu0 33
        %1349 = vperm.xlu0 %1348, %v998
        %v1350 = vpop.permute.xlu0 %1349
        %v1352 = vmul.f32 %v1350, %v973
        %v1353 = vmul.f32 %v1350, %v974
        %v1354 = vadd.f32 %v1346, %v1352
        %v1355 = vadd.f32 %v1347, %v1353
        %1356 = vset.pattern.permute.xlu0 34
        %1357 = vperm.xlu0 %1356, %v998
        %v1358 = vpop.permute.xlu0 %1357
        %v1360 = vmul.f32 %v1358, %v996
        %v1361 = vmul.f32 %v1358, %v997
        %v1362 = vadd.f32 %v1354, %v1360
        %v1363 = vadd.f32 %v1355, %v1361
        %v1366 = vcombine.low %v1362, %v1363
        %v1368 = vunpack.c.l.s4 1983009808
        %v1369 = vunpack.c.0.s8 %v1368
        %v1370 = vlaneseq
        %v1371 = vshrl.u32 %v1370, 7
        %v1372 = vsub.s32 %v1369, %v1371
        %v1373 = vrot.slane %v1366, %v1372
        %1375 = vst [vmem:[#allocation3 + $0x2] sm:$0xf] %v1373
        %v1376 = vld [vmem:[#allocation3 + $0x2] sm:$0x3f]
        %1378 = vrot.lane.b32.xlu0 %v1376, 64
        %v1379 = vpop.permute.xlu0 %1378
        %v1380 = vrot.slane %v1379, 6
        %vm1381 = vcmask 523264
        %v1382 = vsel %vm1381, %v1380, %v1379
        %v1384 = vadd.f32 %v1307, %v1382
        %1385 = vset.pattern.permute.xlu0 35
        %1386 = vperm.xlu0 %1385, %v998
        %v1387 = vpop.permute.xlu0 %1386
        %v1389 = vmul.f32 %v1387, %v864
        %v1390 = vmul.f32 %v1387, %v865
        %v1391 = vadd.f32 %v1389, 0.0
        %v1392 = vadd.f32 %v1390, 0.0
        %1393 = vset.pattern.permute.xlu0 36
        %1394 = vperm.xlu0 %1393, %v998
        %v1395 = vpop.permute.xlu0 %1394
        %v1397 = vmul.f32 %v1395, %v886
        %v1398 = vmul.f32 %v1395, %v887
        %v1399 = vadd.f32 %v1391, %v1397
        %v1400 = vadd.f32 %v1392, %v1398
        %1401 = vset.pattern.permute.xlu0 37
        %1402 = vperm.xlu0 %1401, %v998
        %v1403 = vpop.permute.xlu0 %1402
        %v1405 = vmul.f32 %v1403, %v908
        %v1406 = vmul.f32 %v1403, %v909
        %v1407 = vadd.f32 %v1399, %v1405
        %v1408 = vadd.f32 %v1400, %v1406
        %1409 = vset.pattern.permute.xlu0 38
        %1410 = vperm.xlu0 %1409, %v998
        %v1411 = vpop.permute.xlu0 %1410
        %v1413 = vmul.f32 %v1411, %v1035
        %v1414 = vmul.f32 %v1411, %v1036
        %v1415 = vadd.f32 %v1407, %v1413
        %v1416 = vadd.f32 %v1408, %v1414
        %1417 = vset.pattern.permute.xlu0 39
        %1418 = vperm.xlu0 %1417, %v998
        %v1419 = vpop.permute.xlu0 %1418
        %v1421 = vmul.f32 %v1419, %v950
        %v1422 = vmul.f32 %v1419, %v951
        %v1423 = vadd.f32 %v1415, %v1421
        %v1424 = vadd.f32 %v1416, %v1422
        %1425 = vset.pattern.permute.xlu0 40
        %1426 = vperm.xlu0 %1425, %v998
        %v1427 = vpop.permute.xlu0 %1426
        %v1429 = vmul.f32 %v1427, %v973
        %v1430 = vmul.f32 %v1427, %v974
        %v1431 = vadd.f32 %v1423, %v1429
        %v1432 = vadd.f32 %v1424, %v1430
        %1433 = vset.pattern.permute.xlu0 41
        %1434 = vperm.xlu0 %1433, %v998
        %v1435 = vpop.permute.xlu0 %1434
        %v1437 = vmul.f32 %v1435, %v996
        %v1438 = vmul.f32 %v1435, %v997
        %v1439 = vadd.f32 %v1431, %v1437
        %v1440 = vadd.f32 %v1432, %v1438
        %v1443 = vcombine.low %v1439, %v1440
        %v1445 = vunpack.c.l.s4 1983009808
        %v1446 = vunpack.c.0.s8 %v1445
        %v1447 = vlaneseq
        %v1448 = vshrl.u32 %v1447, 7
        %v1449 = vsub.s32 %v1446, %v1448
        %v1450 = vrot.slane %v1443, %v1449
        %1452 = vst [vmem:[#allocation3 + $0x2] sm:$0xf] %v1450
        %v1453 = vld [vmem:[#allocation3 + $0x2] sm:$0x3f]
        %1455 = vrot.lane.b32.xlu0 %v1453, 48
        %v1456 = vpop.permute.xlu0 %1455
        %v1457 = vrot.slane %v1456, 6
        %vm1458 = vcmask 392192
        %v1459 = vsel %vm1458, %v1457, %v1456
        %v1461 = vadd.f32 %v1384, %v1459
        %1462 = vset.pattern.permute.xlu0 42
        %1463 = vperm.xlu0 %1462, %v998
        %v1464 = vpop.permute.xlu0 %1463
        %v1466 = vmul.f32 %v1464, %v864
        %v1467 = vmul.f32 %v1464, %v865
        %v1468 = vadd.f32 %v1466, 0.0
        %v1469 = vadd.f32 %v1467, 0.0
        %1470 = vset.pattern.permute.xlu0 43
        %1471 = vperm.xlu0 %1470, %v998
        %v1472 = vpop.permute.xlu0 %1471
        %v1474 = vmul.f32 %v1472, %v886
        %v1475 = vmul.f32 %v1472, %v887
        %v1476 = vadd.f32 %v1468, %v1474
        %v1477 = vadd.f32 %v1469, %v1475
        %1478 = vset.pattern.permute.xlu0 44
        %1479 = vperm.xlu0 %1478, %v998
        %v1480 = vpop.permute.xlu0 %1479
        %v1482 = vmul.f32 %v1480, %v908
        %v1483 = vmul.f32 %v1480, %v909
        %v1484 = vadd.f32 %v1476, %v1482
        %v1485 = vadd.f32 %v1477, %v1483
        %1486 = vset.pattern.permute.xlu0 45
        %1487 = vperm.xlu0 %1486, %v998
        %v1488 = vpop.permute.xlu0 %1487
        %v1490 = vmul.f32 %v1488, %v1035
        %v1491 = vmul.f32 %v1488, %v1036
        %v1492 = vadd.f32 %v1484, %v1490
        %v1493 = vadd.f32 %v1485, %v1491
        %1494 = vset.pattern.permute.xlu0 46
        %1495 = vperm.xlu0 %1494, %v998
        %v1496 = vpop.permute.xlu0 %1495
        %v1498 = vmul.f32 %v1496, %v950
        %v1499 = vmul.f32 %v1496, %v951
        %v1500 = vadd.f32 %v1492, %v1498
        %v1501 = vadd.f32 %v1493, %v1499
        %1502 = vset.pattern.permute.xlu0 47
        %1503 = vperm.xlu0 %1502, %v998
        %v1504 = vpop.permute.xlu0 %1503
        %v1506 = vmul.f32 %v1504, %v973
        %v1507 = vmul.f32 %v1504, %v974
        %v1508 = vadd.f32 %v1500, %v1506
        %v1509 = vadd.f32 %v1501, %v1507
        %1510 = vset.pattern.permute.xlu0 48
        %1511 = vperm.xlu0 %1510, %v998
        %v1512 = vpop.permute.xlu0 %1511
        %v1514 = vmul.f32 %v1512, %v996
        %v1515 = vmul.f32 %v1512, %v997
        %v1516 = vadd.f32 %v1508, %v1514
        %v1517 = vadd.f32 %v1509, %v1515
        %v1520 = vcombine.low %v1516, %v1517
        %v1522 = vunpack.c.l.s4 1983009808
        %v1523 = vunpack.c.0.s8 %v1522
        %v1524 = vlaneseq
        %v1525 = vshrl.u32 %v1524, 7
        %v1526 = vsub.s32 %v1523, %v1525
        %v1527 = vrot.slane %v1520, %v1526
        %1529 = vst [vmem:[#allocation3 + $0x2] sm:$0xf] %v1527
        %v1530 = vld [vmem:[#allocation3 + $0x2] sm:$0x3f]
        %1532 = vrot.lane.b32.xlu0 %v1530, 32
        %v1533 = vpop.permute.xlu0 %1532
        %v1534 = vrot.slane %v1533, 6
        %v1535 = vsel %vm561, %v1534, %v1533
        %v1537 = vadd.f32 %v1461, %v1535
        %v1539 = vrot.slane %v1537, 7
        %v1540 = vrot.slane %v1539, 2
        %v1542 = vadd.f32 %v1537, %v1540
        %s1543 = sld [smem:[#allocation10]]
        %v1544 = vstv %s1543
        %v1545 = vmul.f32 %v1542, %v1544
        %s1546 = sld [smem:[#allocation10 + $0x1]]
        %v1547 = vstv %s1546
        %v1548 = vadd.f32 %v1545, %v1547
        %v1549 = vxor.u32 %v1548, 2147483648
        %v1550 = vmul.f32 %v1549, 1.442695
        %v1551 = vpow.pop %v1550
        %v1552 = vadd.f32 %v1551, 1.0
        %v1553 = vrcp.pop %v1552
        %v1554 = vmul.f32 1.0, %v1553
        %v1555 = vld [vmem:[%s357] sm:$0xff]
        %v1556 = vld [vmem:[%s357 + $0x8] sm:$0xff]
        %v1557 = vld [vmem:[%s357 + $0x10] sm:$0xff]
        %v1558 = vld [vmem:[%s357 + $0x18] sm:$0xff]
        %v1559 = vld [vmem:[%s357 + $0x20] sm:$0xff]
        %v1560 = vld [vmem:[%s357 + $0x28] sm:$0xff]
        %v1561 = vld [vmem:[%s357 + $0x30] sm:$0xff]
        %v1562 = vld [vmem:[%s357 + $0x38] sm:$0xff]
        %1564 = vset.pattern.permute.xlu0 0
        %1565 = vperm.xlu0 %1564, %v803
        %v1566 = vpop.permute.xlu0 %1565
        %1569 = vset.pattern.permute.xlu0 0
        %1570 = vperm.xlu0 %1569, %v805
        %v1571 = vpop.permute.xlu0 %1570
        %1574 = vset.pattern.permute.xlu0 0
        %1575 = vperm.xlu0 %1574, %v807
        %v1576 = vpop.permute.xlu0 %1575
        %1579 = vset.pattern.permute.xlu0 0
        %1580 = vperm.xlu0 %1579, %v809
        %v1581 = vpop.permute.xlu0 %1580
        %v1583 = vmul.f32 %v1555, %v1566
        %v1584 = vmul.f32 %v1556, %v1566
        %v1585 = vmul.f32 %v1557, %v1571
        %v1586 = vmul.f32 %v1558, %v1571
        %v1587 = vmul.f32 %v1559, %v1576
        %v1588 = vmul.f32 %v1560, %v1576
        %v1589 = vmul.f32 %v1561, %v1581
        %v1590 = vmul.f32 %v1562, %v1581
        %1591 = vst [vmem:[%s408] sm:$0xff] %v1583
        %1592 = vst [vmem:[%s408 + $0x8] sm:$0xff] %v1584
        %1593 = vst [vmem:[%s408 + $0x10] sm:$0xff] %v1585
        %1594 = vst [vmem:[%s408 + $0x18] sm:$0xff] %v1586
        %1595 = vst [vmem:[%s408 + $0x20] sm:$0xff] %v1587
        %1596 = vst [vmem:[%s408 + $0x28] sm:$0xff] %v1588
        %1597 = vst [vmem:[%s408 + $0x30] sm:$0xff] %v1589
        %1598 = vst [vmem:[%s408 + $0x38] sm:$0xff] %v1590
        %v1599 = vld [vmem:[%s366] sm:$0xff]
        %v1600 = vld [vmem:[%s366 + $0x8] sm:$0xff]
        %v1601 = vld [vmem:[%s366 + $0x10] sm:$0xff]
        %v1602 = vld [vmem:[%s366 + $0x18] sm:$0xff]
        %v1603 = vld [vmem:[%s366 + $0x20] sm:$0xff]
        %v1604 = vld [vmem:[%s366 + $0x28] sm:$0xff]
        %v1605 = vld [vmem:[%s366 + $0x30] sm:$0xff]
        %v1606 = vld [vmem:[%s366 + $0x38] sm:$0xff]
        %v1608 = vlaneseq
        %v1609 = vshrl.u32 %v1608, 7
        %v1610 = vsub.s32 0, %v1609
        %v1611 = vrot.slane %v1554, %v1610
        %v1612 = vlaneseq
        %v1613 = vshrl.u32 %v1612, 7
        %v1614 = vsub.s32 2, %v1613
        %v1615 = vrot.slane %v1554, %v1614
        %v1616 = vlaneseq
        %v1617 = vshrl.u32 %v1616, 7
        %v1618 = vsub.s32 4, %v1617
        %v1619 = vrot.slane %v1554, %v1618
        %v1623 = vlaneseq
        %v1624 = vshrl.u32 %v1623, 7
        %v1625 = vsub.s32 0, %v1624
        %v1626 = vrot.slane %v1611, %v1625
        %v1627 = vlaneseq
        %v1628 = vshrl.u32 %v1627, 7
        %v1629 = vsub.s32 0, %v1628
        %v1630 = vrot.slane %v1615, %v1629
        %v1631 = vlaneseq
        %v1632 = vshrl.u32 %v1631, 7
        %v1633 = vsub.s32 0, %v1632
        %v1634 = vrot.slane %v1619, %v1633
        %1638 = vrot.lane.b32.xlu0 %v1626, 48
        %v1639 = vpop.permute.xlu0 %1638
        %1640 = vrot.lane.b32.xlu0 %v1630, 48
        %v1641 = vpop.permute.xlu0 %1640
        %1642 = vrot.lane.b32.xlu0 %v1634, 48
        %v1643 = vpop.permute.xlu0 %1642
        %v1644 = vsel %vm1458, %v1639, %v1641
        %v1645 = vsel %vm1458, %v1641, %v1643
        %v1648 = vmul.f32 %v1599, %v1644
        %v1649 = vmul.f32 %v1600, %v1645
        %v1650 = vmul.f32 %v1601, %v1644
        %v1651 = vmul.f32 %v1602, %v1645
        %v1652 = vmul.f32 %v1603, %v1644
        %v1653 = vmul.f32 %v1604, %v1645
        %v1654 = vmul.f32 %v1605, %v1644
        %v1655 = vmul.f32 %v1606, %v1645
        %1656 = vst [vmem:[%s415] sm:$0xff] %v1648
        %1657 = vst [vmem:[%s415 + $0x8] sm:$0xff] %v1649
        %1658 = vst [vmem:[%s415 + $0x10] sm:$0xff] %v1650
        %1659 = vst [vmem:[%s415 + $0x18] sm:$0xff] %v1651
        %1660 = vst [vmem:[%s415 + $0x20] sm:$0xff] %v1652
        %1661 = vst [vmem:[%s415 + $0x28] sm:$0xff] %v1653
        %1662 = vst [vmem:[%s415 + $0x30] sm:$0xff] %v1654
        %1663 = vst [vmem:[%s415 + $0x38] sm:$0xff] %v1655
        %s1664 = sand.u32 %s220, 1
        %s1665 = scalar_lea.sflag [#allocation6], %s1664
        %s1666 = sand.u32 %s220, 1
        %s1667 = smul.addr %s1666, 64
        %s1668 = scalar_lea.vmem [#allocation11], %s1667
        %s1669 = sand.u32 %s246, 1
        %s1670 = scalar_lea.sflag [#allocation13], %s1669
        %s1671 = sand.u32 %s246, 1
        %s1672 = smul.addr %s1671, 64
        %s1673 = scalar_lea.vmem [#allocation12], %s1672
        // Predicated region
        $region65: #{tpu_custom_call.1} parent=51 // pred_check
          %p1674 = pneg %p230
        $region66: #{tpu_custom_call.1} parent=51 // pred_check_branch
          %1676 = sbr.rel (%p1674) target = $region68
        $region67: #{tpu_custom_call.1} parent=51 // pred_region
          %s1678 = ssub.s32 1024, 1024
          %1679 = vsyncadd %s1665, %s1678
          %s1680 = smul.addr %s34, 8
          %s1681 = smul.addr %s1680, 128
          %s1682 = scalar_lea.hbm %s8, %s1681
          %s1683 = sshll.u32 %s1668, 4
          %s1684 = int_to_ptr.vmem [resolvable:$true] %s1683
          %1689 = dma.vmem_to_hbm [thread:$0]  %s1684, 1024, %s1682, %s1665, 256, 256, 16
        $region68: #{tpu_custom_call.1} parent=51 // pred_fallthru
          _
        // Predicated region
        $region69: #{tpu_custom_call.1} parent=51 // pred_check
          %p1690 = pneg %p256
        $region70: #{tpu_custom_call.1} parent=51 // pred_check_branch
          %1692 = sbr.rel (%p1690) target = $region72
        $region71: #{tpu_custom_call.1} parent=51 // pred_region
          %s1694 = ssub.s32 1024, 1024
          %1695 = vsyncadd %s1670, %s1694
          %s1696 = smul.addr %s34, 8
          %s1697 = smul.addr %s1696, 128
          %s1698 = scalar_lea.hbm %s9, %s1697
          %s1699 = sshll.u32 %s1673, 4
          %s1700 = int_to_ptr.vmem [resolvable:$true] %s1699
          %1705 = dma.vmem_to_hbm [thread:$0]  %s1700, 1024, %s1698, %s1670, 256, 256, 16
        $region72: #{tpu_custom_call.1} parent=51 // pred_fallthru
          _
      $region52: #{tpu_custom_call.1} parent=5 // pred_fallthru
        _
      %p1706 = scmp.le.s32.totalorder 2, %s29
      // Predicated region
      $region73: #{tpu_custom_call.1} parent=5 // pred_check
        %p1707 = pneg %p1706
      $region74: #{tpu_custom_call.1} parent=5 // pred_check_branch
        %1709 = sbr.rel (%p1707) target = $region76
      $region75: #{tpu_custom_call.1} parent=5 // pred_region
        %s1710 = ssub.s32 %s29, 2
        // Predicated region
        $region77: #{tpu_custom_call.1} parent=75 // pred_check
          %p1711 = pneg %p236
        $region78: #{tpu_custom_call.1} parent=75 // pred_check_branch
          %1713 = sbr.rel (%p1711) target = $region80
        $region79: #{tpu_custom_call.1} parent=75 // pred_region
          %s1714 = sand.u32 %s221, 1
          %s1715 = scalar_lea.sflag [#allocation6], %s1714
          %s1716 = sand.u32 %s221, 1
          %s1717 = smul.addr %s1716, 64
          %s1718 = scalar_lea.vmem [#allocation11], %s1717
          %1719 = dma.done %s1715, 1024
        $region80: #{tpu_custom_call.1} parent=75 // pred_fallthru
          _
        // Predicated region
        $region81: #{tpu_custom_call.1} parent=75 // pred_check
          %p1720 = pneg %p262
        $region82: #{tpu_custom_call.1} parent=75 // pred_check_branch
          %1722 = sbr.rel (%p1720) target = $region84
        $region83: #{tpu_custom_call.1} parent=75 // pred_region
          %s1723 = sand.u32 %s247, 1
          %s1724 = scalar_lea.sflag [#allocation13], %s1723
          %s1725 = sand.u32 %s247, 1
          %s1726 = smul.addr %s1725, 64
          %s1727 = scalar_lea.vmem [#allocation12], %s1726
          %1728 = dma.done %s1724, 1024
        $region84: #{tpu_custom_call.1} parent=75 // pred_fallthru
          _
      $region76: #{tpu_custom_call.1} parent=5 // pred_fallthru
        _
    $region6: #{tpu_custom_call.1} parent=1 // loop_footer
      %s33 = sadd.s32 1, %s29
    $region7: #{tpu_custom_call.1} parent=1 // loop_footer_branch
      %28 = sbr.rel target = $region3
    $region8: #{tpu_custom_call.1} parent=1 // loop_exit
      _
    %1729 = vsyncpa [#allocation5], 1
    %s1730 = scalar_lea.sflag [#allocation5], 1
    %1731 = vsyncpa %s1730, 1
    %1732 = vsyncpa [#allocation9], 1
    %s1733 = scalar_lea.sflag [#allocation9], 1
    %1734 = vsyncpa %s1733, 1
    %1735 = vsyncpa [#allocation6], 1
    %s1736 = scalar_lea.sflag [#allocation6], 1
    %1737 = vsyncpa %s1736, 1
    %1738 = vsyncpa [#allocation13], 1
    %s1739 = scalar_lea.sflag [#allocation13], 1
    %1740 = vsyncpa %s1739, 1
    %1741 = vsyncpa [#allocation7], 1
    %s1742 = scalar_lea.sflag [#allocation7], 1
    %1743 = vsyncpa %s1742, 1

</llo_original>
